<compile_context>
chip_gen: v5e
topology: v5e:2x2
jax: 0.10.0
libtpu: 0.0.40
codegen_flags: <defaults>
</compile_context>

<pallas_src>
import math
from functools import partial

import jax
import jax.numpy as jnp
from jax import lax
from jax.experimental import pallas as pl
from jax.experimental.pallas import tpu as pltpu


def _layernorm_pt(y, alpha, beta, eps):
    # Mirrors the custom PyTorch Norm module: alpha*(x-mean)/(std+eps)+beta with
    # the *unbiased* std (divide by N-1). Exact reciprocal (runs once per tile;
    # approx would add error for zero perf gain).
    d = y.shape[-1]
    mean = jnp.mean(y, axis=-1, keepdims=True)
    centered = y - mean
    var = jnp.sum(centered * centered, axis=-1, keepdims=True) * (1.0 / (d - 1))
    std = jnp.sqrt(var)
    return alpha * centered / (std + eps) + beta


def encoder_layer_kernel(x_ref, wqkv_ref, bqkv_ref, wo_ref, bo_ref,
                         ln1a_ref, ln1b_ref,
                         w1_ref, b1_ref, w2_ref, b2_ref,
                         ln2a_ref, ln2b_ref,
                         o_ref, *, heads, eps):
    bf16 = jnp.bfloat16
    x = x_ref[...]                                   # (S, D) f32
    xb = x.astype(bf16)
    D = x.shape[-1]
    d_k = D // heads
    scale = 1.0 / math.sqrt(d_k)

    # Fused Q/K/V projection: one (S, D) @ (D, 3D) matmul, bf16 on the MXU,
    # f32 accumulation; bias stays f32.
    qkv = jnp.dot(xb, wqkv_ref[...],
                  preferred_element_type=jnp.float32) + bqkv_ref[...]   # (S, 3D)

    # Static unrolled loop over heads (H is small and compile-time constant).
    ctx_heads = []
    for h in range(heads):
        q = qkv[:, h * d_k:(h + 1) * d_k] * scale              # scale folded into q
        k = qkv[:, D + h * d_k:D + (h + 1) * d_k]
        v = qkv[:, 2 * D + h * d_k:2 * D + (h + 1) * d_k]

        # scores = (q*scale) @ k^T without materializing k^T.
        s = lax.dot_general(q.astype(bf16), k.astype(bf16),
                            dimension_numbers=(((1,), (1,)), ((), ())),
                            preferred_element_type=jnp.float32)         # (S, S)
        s = s - jnp.max(s, axis=-1, keepdims=True)
        e = jnp.exp(s)
        p = e * pl.reciprocal(jnp.sum(e, axis=-1, keepdims=True), approx=True)

        ctx_heads.append(jnp.dot(p.astype(bf16), v.astype(bf16),
                                 preferred_element_type=jnp.float32))   # (S, d_k)

    concat = jnp.concatenate(ctx_heads, axis=-1)                        # (S, D)

    # Output projection once on the concatenated context.
    attn = jnp.dot(concat.astype(bf16), wo_ref[...],
                   preferred_element_type=jnp.float32) + bo_ref[...]    # (S, D)

    y = x + attn                                     # dropout1 = identity
    y = _layernorm_pt(y, ln1a_ref[...], ln1b_ref[...], eps)

    # Feed-forward: relu(y @ W1 + b1) @ W2 + b2 (dropout = identity).
    h1 = jnp.maximum(
        jnp.dot(y.astype(bf16), w1_ref[...],
                preferred_element_type=jnp.float32) + b1_ref[...], 0.0)
    ff = jnp.dot(h1.astype(bf16), w2_ref[...],
                 preferred_element_type=jnp.float32) + b2_ref[...]

    z = y + ff                                       # dropout2 = identity
    z = _layernorm_pt(z, ln2a_ref[...], ln2b_ref[...], eps)
    o_ref[...] = z.astype(o_ref.dtype)


def encoder_layer(x, params, *, heads, eps=1e-6):
    B, S, D = x.shape
    if D % heads != 0:
        raise ValueError(f"d_model={D} must be divisible by heads={heads}")
    d_ff = params["w1"].shape[1]
    bf16 = jnp.bfloat16

    # Fused QKV weight/bias prepared once in the wrapper (layout plumbing only).
    wqkv = jnp.concatenate([params["wq"], params["wk"], params["wv"]],
                           axis=1).astype(bf16)                         # (D, 3D)
    bqkv = jnp.concatenate([params["bq"], params["bk"], params["bv"]],
                           axis=1)                                      # (1, 3D) f32
    wo = params["wo"].astype(bf16)                                      # (D, D)
    w1 = params["w1"].astype(bf16)                                      # (D, d_ff)
    w2 = params["w2"].astype(bf16)                                      # (d_ff, D)

    def const2(a, b):  # full 2-D block, constant index_map -> resident across grid
        return pl.BlockSpec((a, b), lambda bb: (0, 0))

    in_specs = [
        pl.BlockSpec((None, S, D), lambda bb: (bb, 0, 0)),   # x (per batch)
        const2(D, 3 * D), const2(1, 3 * D),                  # fused QKV
        const2(D, D), const2(1, D),                          # out projection
        const2(1, D), const2(1, D),                          # norm1 alpha/beta
        const2(D, d_ff), const2(1, d_ff),                    # ff linear1
        const2(d_ff, D), const2(1, D),                       # ff linear2
        const2(1, D), const2(1, D),                          # norm2 alpha/beta
    ]
    out_specs = pl.BlockSpec((None, S, D), lambda bb: (bb, 0, 0))

    kernel = partial(encoder_layer_kernel, heads=heads, eps=eps)
    return pl.pallas_call(
        kernel,
        out_shape=jax.ShapeDtypeStruct((B, S, D), x.dtype),
        grid_spec=pltpu.PrefetchScalarGridSpec(
            num_scalar_prefetch=0,
            grid=(B,),
            in_specs=in_specs,
            out_specs=out_specs,
        ),
        compiler_params=pltpu.CompilerParams(
            dimension_semantics=("parallel",),
            vmem_limit_bytes=32 * 1024 * 1024,
        ),
    )(x, wqkv, bqkv, wo, params["bo"],
      params["ln1a"], params["ln1b"],
      w1, params["b1"], w2, params["b2"],
      params["ln2a"], params["ln2b"])


def _layernorm_pt_ref(y, alpha, beta, eps):
    d = y.shape[-1]
    mean = jnp.mean(y, axis=-1, keepdims=True)
    var = jnp.sum((y - mean) ** 2, axis=-1, keepdims=True) / (d - 1)
    std = jnp.sqrt(var)
    return alpha * (y - mean) / (std + eps) + beta


def ref_encoder_layer(x, p, *, heads, eps=1e-6):
    # Pure-JAX f32 reference mirroring the PyTorch forward (dropout = identity).
    B, S, D = x.shape
    d_k = D // heads
    q = x @ p["wq"] + p["bq"][0]
    k = x @ p["wk"] + p["bk"][0]
    v = x @ p["wv"] + p["bv"][0]
    q = q.reshape(B, S, heads, d_k).transpose(0, 2, 1, 3)
    k = k.reshape(B, S, heads, d_k).transpose(0, 2, 1, 3)
    v = v.reshape(B, S, heads, d_k).transpose(0, 2, 1, 3)
    s = jnp.einsum("bhqd,bhkd->bhqk", q, k) / math.sqrt(d_k)
    a = jax.nn.softmax(s, axis=-1)
    ctx = jnp.einsum("bhqk,bhkd->bhqd", a, v)
    concat = ctx.transpose(0, 2, 1, 3).reshape(B, S, D)
    attn = concat @ p["wo"] + p["bo"][0]
    y = x + attn
    y = _layernorm_pt_ref(y, p["ln1a"][0], p["ln1b"][0], eps)
    h1 = jax.nn.relu(y @ p["w1"] + p["b1"][0])
    ff = h1 @ p["w2"] + p["b2"][0]
    z = y + ff
    return _layernorm_pt_ref(z, p["ln2a"][0], p["ln2b"][0], eps)


def init_params(key, d_model, d_ff):
    ks = jax.random.split(key, 12)
    n = lambda k, shape, s=0.1: (s * jax.random.normal(k, shape)).astype(jnp.float32)
    return {
        "wq": n(ks[0], (d_model, d_model)), "bq": n(ks[1], (1, d_model), 0.02),
        "wk": n(ks[2], (d_model, d_model)), "bk": n(ks[3], (1, d_model), 0.02),
        "wv": n(ks[4], (d_model, d_model)), "bv": n(ks[5], (1, d_model), 0.02),
        "wo": n(ks[6], (d_model, d_model)), "bo": n(ks[7], (1, d_model), 0.02),
        "ln1a": jnp.ones((1, d_model), jnp.float32),
        "ln1b": jnp.zeros((1, d_model), jnp.float32),
        "w1": n(ks[8], (d_model, d_ff), 0.05), "b1": n(ks[9], (1, d_ff), 0.02),
        "w2": n(ks[10], (d_ff, d_model), 0.05), "b2": n(ks[11], (1, d_model), 0.02),
        "ln2a": jnp.ones((1, d_model), jnp.float32),
        "ln2b": jnp.zeros((1, d_model), jnp.float32),
    }


if __name__ == "__main__":
    B, S, D, HEADS, D_FF = 2, 8, 32, 4, 2048
    key = jax.random.PRNGKey(0)
    kx, kp = jax.random.split(key)
    x = jax.random.normal(kx, (B, S, D), dtype=jnp.float32)
    params = init_params(kp, D, D_FF)
    # TODO(synk): mask path not implemented (PyTorch forward crashes for mask != None: `unsequeeze` typo).

    out = jax.block_until_ready(encoder_layer(x, params, heads=HEADS))
    ref = ref_encoder_layer(x, params, heads=HEADS)
    assert out.shape == (B, S, D)
    max_err = jnp.max(jnp.abs(out - ref))
    assert jnp.allclose(out, ref, atol=2e-2, rtol=2e-2), f"max abs err {max_err}"
    print("KERNEL_OK")
</pallas_src>

<mosaic_0001>
module attributes {stable_mosaic.version = 11 : i64} {
  func.func @encoder_layer_kernel(%arg0: i32, %arg1: memref<1x8x32xf32, #tpu.memory_space<vmem>>, %arg2: memref<32x96xbf16, #tpu.memory_space<vmem>>, %arg3: memref<1x96xf32, #tpu.memory_space<vmem>>, %arg4: memref<32x32xbf16, #tpu.memory_space<vmem>>, %arg5: memref<1x32xf32, #tpu.memory_space<vmem>>, %arg6: memref<1x32xf32, #tpu.memory_space<vmem>>, %arg7: memref<1x32xf32, #tpu.memory_space<vmem>>, %arg8: memref<32x2048xbf16, #tpu.memory_space<vmem>>, %arg9: memref<1x2048xf32, #tpu.memory_space<vmem>>, %arg10: memref<2048x32xbf16, #tpu.memory_space<vmem>>, %arg11: memref<1x32xf32, #tpu.memory_space<vmem>>, %arg12: memref<1x32xf32, #tpu.memory_space<vmem>>, %arg13: memref<1x32xf32, #tpu.memory_space<vmem>>, %arg14: memref<1x8x32xf32, #tpu.memory_space<vmem>>) attributes {dimension_semantics = [#tpu.dimension_semantics<parallel>], iteration_bounds = array<i64: 2>, scalar_prefetch = 0 : i64, scratch_operands = 0 : i64, tpu.core_type = #tpu.core_type<tc>, window_params = [{transform_indices = @transform_0, window_bounds = array<i64: 1, 8, 32>}, {pipeline_mode = #tpu.pipeline_mode<synchronous>, transform_indices = @transform_1, window_bounds = array<i64: 32, 96>}, {pipeline_mode = #tpu.pipeline_mode<synchronous>, transform_indices = @transform_2, window_bounds = array<i64: 1, 96>}, {pipeline_mode = #tpu.pipeline_mode<synchronous>, transform_indices = @transform_3, window_bounds = array<i64: 32, 32>}, {pipeline_mode = #tpu.pipeline_mode<synchronous>, transform_indices = @transform_4, window_bounds = array<i64: 1, 32>}, {pipeline_mode = #tpu.pipeline_mode<synchronous>, transform_indices = @transform_5, window_bounds = array<i64: 1, 32>}, {pipeline_mode = #tpu.pipeline_mode<synchronous>, transform_indices = @transform_6, window_bounds = array<i64: 1, 32>}, {pipeline_mode = #tpu.pipeline_mode<synchronous>, transform_indices = @transform_7, window_bounds = array<i64: 32, 2048>}, {pipeline_mode = #tpu.pipeline_mode<synchronous>, transform_indices = @transform_8, window_bounds = array<i64: 1, 2048>}, {pipeline_mode = #tpu.pipeline_mode<synchronous>, transform_indices = @transform_9, window_bounds = array<i64: 2048, 32>}, {pipeline_mode = #tpu.pipeline_mode<synchronous>, transform_indices = @transform_10, window_bounds = array<i64: 1, 32>}, {pipeline_mode = #tpu.pipeline_mode<synchronous>, transform_indices = @transform_11, window_bounds = array<i64: 1, 32>}, {pipeline_mode = #tpu.pipeline_mode<synchronous>, transform_indices = @transform_12, window_bounds = array<i64: 1, 32>}, {transform_indices = @transform_13, window_bounds = array<i64: 1, 8, 32>}]} {
    %c0 = arith.constant 0 : index
    %c0_0 = arith.constant 0 : index
    %c0_1 = arith.constant 0 : index
    %0 = vector.load %arg1[%c0, %c0_0, %c0_1] : memref<1x8x32xf32, #tpu.memory_space<vmem>>, vector<1x8x32xf32>
    %1 = vector.shape_cast %0 : vector<1x8x32xf32> to vector<8x32xf32>
    %2 = arith.truncf %1 : vector<8x32xf32> to vector<8x32xbf16>
    %c0_2 = arith.constant 0 : index
    %c0_3 = arith.constant 0 : index
    %3 = vector.load %arg2[%c0_2, %c0_3] : memref<32x96xbf16, #tpu.memory_space<vmem>>, vector<32x96xbf16>
    %cst = arith.constant dense<0.000000e+00> : vector<8x96xf32>
    %4 = tpu.matmul %2, %3, %cst {dimension_numbers = #tpu.dot_dimension_numbers<[1], [0], [0], [1], [0, 0, 1, 1], [], []>} : vector<8x32xbf16>, vector<32x96xbf16>, vector<8x96xf32> -> vector<8x96xf32>
    %c0_4 = arith.constant 0 : index
    %c0_5 = arith.constant 0 : index
    %5 = vector.load %arg3[%c0_4, %c0_5] : memref<1x96xf32, #tpu.memory_space<vmem>>, vector<1x96xf32>
    %6 = vector.broadcast %5 : vector<1x96xf32> to vector<8x96xf32>
    %7 = arith.addf %4, %6 : vector<8x96xf32>
    %8 = vector.extract_strided_slice %7 {offsets = [0, 0], sizes = [8, 8], strides = [1, 1]} : vector<8x96xf32> to vector<8x8xf32>
    %cst_6 = arith.constant 0.353553385 : f32
    %9 = vector.broadcast %cst_6 : f32 to vector<8x8xf32>
    %10 = arith.mulf %8, %9 : vector<8x8xf32>
    %11 = vector.extract_strided_slice %7 {offsets = [0, 32], sizes = [8, 8], strides = [1, 1]} : vector<8x96xf32> to vector<8x8xf32>
    %12 = vector.extract_strided_slice %7 {offsets = [0, 64], sizes = [8, 8], strides = [1, 1]} : vector<8x96xf32> to vector<8x8xf32>
    %13 = arith.truncf %10 : vector<8x8xf32> to vector<8x8xbf16>
    %14 = arith.truncf %11 : vector<8x8xf32> to vector<8x8xbf16>
    %cst_7 = arith.constant dense<0.000000e+00> : vector<8x8xf32>
    %15 = tpu.matmul %13, %14, %cst_7 {dimension_numbers = #tpu.dot_dimension_numbers<[1], [1], [0], [0], [0, 0, 1, 0], [], []>} : vector<8x8xbf16>, vector<8x8xbf16>, vector<8x8xf32> -> vector<8x8xf32>
    %cst_8 = arith.constant dense<0xFF800000> : vector<8xf32>
    %16 = vector.multi_reduction <maximumf>, %15, %cst_8 [1] : vector<8x8xf32> to vector<8xf32>
    %17 = vector.shape_cast %16 : vector<8xf32> to vector<8x1xf32>
    %18 = vector.broadcast %17 : vector<8x1xf32> to vector<8x8xf32>
    %19 = arith.subf %15, %18 : vector<8x8xf32>
    %20 = math.exp %19 : vector<8x8xf32>
    %cst_9 = arith.constant dense<0.000000e+00> : vector<8xf32>
    %21 = vector.multi_reduction <add>, %20, %cst_9 [1] : vector<8x8xf32> to vector<8xf32>
    %22 = vector.shape_cast %21 : vector<8xf32> to vector<8x1xf32>
    %23 = tpu.reciprocal %22 {approx = true} : vector<8x1xf32> -> vector<8x1xf32>
    %24 = vector.broadcast %23 : vector<8x1xf32> to vector<8x8xf32>
    %25 = arith.mulf %20, %24 : vector<8x8xf32>
    %26 = arith.truncf %25 : vector<8x8xf32> to vector<8x8xbf16>
    %27 = arith.truncf %12 : vector<8x8xf32> to vector<8x8xbf16>
    %cst_10 = arith.constant dense<0.000000e+00> : vector<8x8xf32>
    %28 = tpu.matmul %26, %27, %cst_10 {dimension_numbers = #tpu.dot_dimension_numbers<[1], [0], [0], [1], [0, 0, 1, 1], [], []>} : vector<8x8xbf16>, vector<8x8xbf16>, vector<8x8xf32> -> vector<8x8xf32>
    %29 = vector.extract_strided_slice %7 {offsets = [0, 8], sizes = [8, 8], strides = [1, 1]} : vector<8x96xf32> to vector<8x8xf32>
    %cst_11 = arith.constant 0.353553385 : f32
    %30 = vector.broadcast %cst_11 : f32 to vector<8x8xf32>
    %31 = arith.mulf %29, %30 : vector<8x8xf32>
    %32 = vector.extract_strided_slice %7 {offsets = [0, 40], sizes = [8, 8], strides = [1, 1]} : vector<8x96xf32> to vector<8x8xf32>
    %33 = vector.extract_strided_slice %7 {offsets = [0, 72], sizes = [8, 8], strides = [1, 1]} : vector<8x96xf32> to vector<8x8xf32>
    %34 = arith.truncf %31 : vector<8x8xf32> to vector<8x8xbf16>
    %35 = arith.truncf %32 : vector<8x8xf32> to vector<8x8xbf16>
    %cst_12 = arith.constant dense<0.000000e+00> : vector<8x8xf32>
    %36 = tpu.matmul %34, %35, %cst_12 {dimension_numbers = #tpu.dot_dimension_numbers<[1], [1], [0], [0], [0, 0, 1, 0], [], []>} : vector<8x8xbf16>, vector<8x8xbf16>, vector<8x8xf32> -> vector<8x8xf32>
    %cst_13 = arith.constant dense<0xFF800000> : vector<8xf32>
    %37 = vector.multi_reduction <maximumf>, %36, %cst_13 [1] : vector<8x8xf32> to vector<8xf32>
    %38 = vector.shape_cast %37 : vector<8xf32> to vector<8x1xf32>
    %39 = vector.broadcast %38 : vector<8x1xf32> to vector<8x8xf32>
    %40 = arith.subf %36, %39 : vector<8x8xf32>
    %41 = math.exp %40 : vector<8x8xf32>
    %cst_14 = arith.constant dense<0.000000e+00> : vector<8xf32>
    %42 = vector.multi_reduction <add>, %41, %cst_14 [1] : vector<8x8xf32> to vector<8xf32>
    %43 = vector.shape_cast %42 : vector<8xf32> to vector<8x1xf32>
    %44 = tpu.reciprocal %43 {approx = true} : vector<8x1xf32> -> vector<8x1xf32>
    %45 = vector.broadcast %44 : vector<8x1xf32> to vector<8x8xf32>
    %46 = arith.mulf %41, %45 : vector<8x8xf32>
    %47 = arith.truncf %46 : vector<8x8xf32> to vector<8x8xbf16>
    %48 = arith.truncf %33 : vector<8x8xf32> to vector<8x8xbf16>
    %cst_15 = arith.constant dense<0.000000e+00> : vector<8x8xf32>
    %49 = tpu.matmul %47, %48, %cst_15 {dimension_numbers = #tpu.dot_dimension_numbers<[1], [0], [0], [1], [0, 0, 1, 1], [], []>} : vector<8x8xbf16>, vector<8x8xbf16>, vector<8x8xf32> -> vector<8x8xf32>
    %50 = vector.extract_strided_slice %7 {offsets = [0, 16], sizes = [8, 8], strides = [1, 1]} : vector<8x96xf32> to vector<8x8xf32>
    %cst_16 = arith.constant 0.353553385 : f32
    %51 = vector.broadcast %cst_16 : f32 to vector<8x8xf32>
    %52 = arith.mulf %50, %51 : vector<8x8xf32>
    %53 = vector.extract_strided_slice %7 {offsets = [0, 48], sizes = [8, 8], strides = [1, 1]} : vector<8x96xf32> to vector<8x8xf32>
    %54 = vector.extract_strided_slice %7 {offsets = [0, 80], sizes = [8, 8], strides = [1, 1]} : vector<8x96xf32> to vector<8x8xf32>
    %55 = arith.truncf %52 : vector<8x8xf32> to vector<8x8xbf16>
    %56 = arith.truncf %53 : vector<8x8xf32> to vector<8x8xbf16>
    %cst_17 = arith.constant dense<0.000000e+00> : vector<8x8xf32>
    %57 = tpu.matmul %55, %56, %cst_17 {dimension_numbers = #tpu.dot_dimension_numbers<[1], [1], [0], [0], [0, 0, 1, 0], [], []>} : vector<8x8xbf16>, vector<8x8xbf16>, vector<8x8xf32> -> vector<8x8xf32>
    %cst_18 = arith.constant dense<0xFF800000> : vector<8xf32>
    %58 = vector.multi_reduction <maximumf>, %57, %cst_18 [1] : vector<8x8xf32> to vector<8xf32>
    %59 = vector.shape_cast %58 : vector<8xf32> to vector<8x1xf32>
    %60 = vector.broadcast %59 : vector<8x1xf32> to vector<8x8xf32>
    %61 = arith.subf %57, %60 : vector<8x8xf32>
    %62 = math.exp %61 : vector<8x8xf32>
    %cst_19 = arith.constant dense<0.000000e+00> : vector<8xf32>
    %63 = vector.multi_reduction <add>, %62, %cst_19 [1] : vector<8x8xf32> to vector<8xf32>
    %64 = vector.shape_cast %63 : vector<8xf32> to vector<8x1xf32>
    %65 = tpu.reciprocal %64 {approx = true} : vector<8x1xf32> -> vector<8x1xf32>
    %66 = vector.broadcast %65 : vector<8x1xf32> to vector<8x8xf32>
    %67 = arith.mulf %62, %66 : vector<8x8xf32>
    %68 = arith.truncf %67 : vector<8x8xf32> to vector<8x8xbf16>
    %69 = arith.truncf %54 : vector<8x8xf32> to vector<8x8xbf16>
    %cst_20 = arith.constant dense<0.000000e+00> : vector<8x8xf32>
    %70 = tpu.matmul %68, %69, %cst_20 {dimension_numbers = #tpu.dot_dimension_numbers<[1], [0], [0], [1], [0, 0, 1, 1], [], []>} : vector<8x8xbf16>, vector<8x8xbf16>, vector<8x8xf32> -> vector<8x8xf32>
    %71 = vector.extract_strided_slice %7 {offsets = [0, 24], sizes = [8, 8], strides = [1, 1]} : vector<8x96xf32> to vector<8x8xf32>
    %cst_21 = arith.constant 0.353553385 : f32
    %72 = vector.broadcast %cst_21 : f32 to vector<8x8xf32>
    %73 = arith.mulf %71, %72 : vector<8x8xf32>
    %74 = vector.extract_strided_slice %7 {offsets = [0, 56], sizes = [8, 8], strides = [1, 1]} : vector<8x96xf32> to vector<8x8xf32>
    %75 = vector.extract_strided_slice %7 {offsets = [0, 88], sizes = [8, 8], strides = [1, 1]} : vector<8x96xf32> to vector<8x8xf32>
    %76 = arith.truncf %73 : vector<8x8xf32> to vector<8x8xbf16>
    %77 = arith.truncf %74 : vector<8x8xf32> to vector<8x8xbf16>
    %cst_22 = arith.constant dense<0.000000e+00> : vector<8x8xf32>
    %78 = tpu.matmul %76, %77, %cst_22 {dimension_numbers = #tpu.dot_dimension_numbers<[1], [1], [0], [0], [0, 0, 1, 0], [], []>} : vector<8x8xbf16>, vector<8x8xbf16>, vector<8x8xf32> -> vector<8x8xf32>
    %cst_23 = arith.constant dense<0xFF800000> : vector<8xf32>
    %79 = vector.multi_reduction <maximumf>, %78, %cst_23 [1] : vector<8x8xf32> to vector<8xf32>
    %80 = vector.shape_cast %79 : vector<8xf32> to vector<8x1xf32>
    %81 = vector.broadcast %80 : vector<8x1xf32> to vector<8x8xf32>
    %82 = arith.subf %78, %81 : vector<8x8xf32>
    %83 = math.exp %82 : vector<8x8xf32>
    %cst_24 = arith.constant dense<0.000000e+00> : vector<8xf32>
    %84 = vector.multi_reduction <add>, %83, %cst_24 [1] : vector<8x8xf32> to vector<8xf32>
    %85 = vector.shape_cast %84 : vector<8xf32> to vector<8x1xf32>
    %86 = tpu.reciprocal %85 {approx = true} : vector<8x1xf32> -> vector<8x1xf32>
    %87 = vector.broadcast %86 : vector<8x1xf32> to vector<8x8xf32>
    %88 = arith.mulf %83, %87 : vector<8x8xf32>
    %89 = arith.truncf %88 : vector<8x8xf32> to vector<8x8xbf16>
    %90 = arith.truncf %75 : vector<8x8xf32> to vector<8x8xbf16>
    %cst_25 = arith.constant dense<0.000000e+00> : vector<8x8xf32>
    %91 = tpu.matmul %89, %90, %cst_25 {dimension_numbers = #tpu.dot_dimension_numbers<[1], [0], [0], [1], [0, 0, 1, 1], [], []>} : vector<8x8xbf16>, vector<8x8xbf16>, vector<8x8xf32> -> vector<8x8xf32>
    %92 = tpu.concatenate %28, %49, %70, %91 in 1 : vector<8x8xf32>, vector<8x8xf32>, vector<8x8xf32>, vector<8x8xf32> -> vector<8x32xf32>
    %93 = arith.truncf %92 : vector<8x32xf32> to vector<8x32xbf16>
    %c0_26 = arith.constant 0 : index
    %c0_27 = arith.constant 0 : index
    %94 = vector.load %arg4[%c0_26, %c0_27] : memref<32x32xbf16, #tpu.memory_space<vmem>>, vector<32x32xbf16>
    %cst_28 = arith.constant dense<0.000000e+00> : vector<8x32xf32>
    %95 = tpu.matmul %93, %94, %cst_28 {dimension_numbers = #tpu.dot_dimension_numbers<[1], [0], [0], [1], [0, 0, 1, 1], [], []>} : vector<8x32xbf16>, vector<32x32xbf16>, vector<8x32xf32> -> vector<8x32xf32>
    %c0_29 = arith.constant 0 : index
    %c0_30 = arith.constant 0 : index
    %96 = vector.load %arg5[%c0_29, %c0_30] : memref<1x32xf32, #tpu.memory_space<vmem>>, vector<1x32xf32>
    %97 = vector.broadcast %96 : vector<1x32xf32> to vector<8x32xf32>
    %98 = arith.addf %95, %97 : vector<8x32xf32>
    %99 = arith.addf %1, %98 : vector<8x32xf32>
    %c0_31 = arith.constant 0 : index
    %c0_32 = arith.constant 0 : index
    %100 = vector.load %arg6[%c0_31, %c0_32] : memref<1x32xf32, #tpu.memory_space<vmem>>, vector<1x32xf32>
    %c0_33 = arith.constant 0 : index
    %c0_34 = arith.constant 0 : index
    %101 = vector.load %arg7[%c0_33, %c0_34] : memref<1x32xf32, #tpu.memory_space<vmem>>, vector<1x32xf32>
    %cst_35 = arith.constant dense<0.000000e+00> : vector<8xf32>
    %102 = vector.multi_reduction <add>, %99, %cst_35 [1] : vector<8x32xf32> to vector<8xf32>
    %103 = vector.shape_cast %102 : vector<8xf32> to vector<8x1xf32>
    %cst_36 = arith.constant 3.200000e+01 : f32
    %104 = vector.broadcast %cst_36 : f32 to vector<8x1xf32>
    %105 = arith.divf %103, %104 : vector<8x1xf32>
    %106 = vector.broadcast %105 : vector<8x1xf32> to vector<8x32xf32>
    %107 = arith.subf %99, %106 : vector<8x32xf32>
    %108 = arith.mulf %107, %107 : vector<8x32xf32>
    %cst_37 = arith.constant dense<0.000000e+00> : vector<8xf32>
    %109 = vector.multi_reduction <add>, %108, %cst_37 [1] : vector<8x32xf32> to vector<8xf32>
    %110 = vector.shape_cast %109 : vector<8xf32> to vector<8x1xf32>
    %cst_38 = arith.constant 0.0322580636 : f32
    %111 = vector.broadcast %cst_38 : f32 to vector<8x1xf32>
    %112 = arith.mulf %110, %111 : vector<8x1xf32>
    %113 = math.sqrt %112 : vector<8x1xf32>
    %114 = vector.broadcast %100 : vector<1x32xf32> to vector<8x32xf32>
    %115 = arith.mulf %114, %107 : vector<8x32xf32>
    %cst_39 = arith.constant 9.99999997E-7 : f32
    %116 = vector.broadcast %cst_39 : f32 to vector<8x1xf32>
    %117 = arith.addf %113, %116 : vector<8x1xf32>
    %118 = vector.broadcast %117 : vector<8x1xf32> to vector<8x32xf32>
    %119 = arith.divf %115, %118 : vector<8x32xf32>
    %120 = vector.broadcast %101 : vector<1x32xf32> to vector<8x32xf32>
    %121 = arith.addf %119, %120 : vector<8x32xf32>
    %122 = arith.truncf %121 : vector<8x32xf32> to vector<8x32xbf16>
    %c0_40 = arith.constant 0 : index
    %c0_41 = arith.constant 0 : index
    %123 = vector.load %arg8[%c0_40, %c0_41] : memref<32x2048xbf16, #tpu.memory_space<vmem>>, vector<32x2048xbf16>
    %cst_42 = arith.constant dense<0.000000e+00> : vector<8x2048xf32>
    %124 = tpu.matmul %122, %123, %cst_42 {dimension_numbers = #tpu.dot_dimension_numbers<[1], [0], [0], [1], [0, 0, 1, 1], [], []>} : vector<8x32xbf16>, vector<32x2048xbf16>, vector<8x2048xf32> -> vector<8x2048xf32>
    %c0_43 = arith.constant 0 : index
    %c0_44 = arith.constant 0 : index
    %125 = vector.load %arg9[%c0_43, %c0_44] : memref<1x2048xf32, #tpu.memory_space<vmem>>, vector<1x2048xf32>
    %126 = vector.broadcast %125 : vector<1x2048xf32> to vector<8x2048xf32>
    %127 = arith.addf %124, %126 : vector<8x2048xf32>
    %cst_45 = arith.constant 0.000000e+00 : f32
    %128 = vector.broadcast %cst_45 : f32 to vector<8x2048xf32>
    %129 = arith.maximumf %127, %128 : vector<8x2048xf32>
    %130 = arith.truncf %129 : vector<8x2048xf32> to vector<8x2048xbf16>
    %c0_46 = arith.constant 0 : index
    %c0_47 = arith.constant 0 : index
    %131 = vector.load %arg10[%c0_46, %c0_47] : memref<2048x32xbf16, #tpu.memory_space<vmem>>, vector<2048x32xbf16>
    %cst_48 = arith.constant dense<0.000000e+00> : vector<8x32xf32>
    %132 = tpu.matmul %130, %131, %cst_48 {dimension_numbers = #tpu.dot_dimension_numbers<[1], [0], [0], [1], [0, 0, 1, 1], [], []>} : vector<8x2048xbf16>, vector<2048x32xbf16>, vector<8x32xf32> -> vector<8x32xf32>
    %c0_49 = arith.constant 0 : index
    %c0_50 = arith.constant 0 : index
    %133 = vector.load %arg11[%c0_49, %c0_50] : memref<1x32xf32, #tpu.memory_space<vmem>>, vector<1x32xf32>
    %134 = vector.broadcast %133 : vector<1x32xf32> to vector<8x32xf32>
    %135 = arith.addf %132, %134 : vector<8x32xf32>
    %136 = arith.addf %121, %135 : vector<8x32xf32>
    %c0_51 = arith.constant 0 : index
    %c0_52 = arith.constant 0 : index
    %137 = vector.load %arg12[%c0_51, %c0_52] : memref<1x32xf32, #tpu.memory_space<vmem>>, vector<1x32xf32>
    %c0_53 = arith.constant 0 : index
    %c0_54 = arith.constant 0 : index
    %138 = vector.load %arg13[%c0_53, %c0_54] : memref<1x32xf32, #tpu.memory_space<vmem>>, vector<1x32xf32>
    %cst_55 = arith.constant dense<0.000000e+00> : vector<8xf32>
    %139 = vector.multi_reduction <add>, %136, %cst_55 [1] : vector<8x32xf32> to vector<8xf32>
    %140 = vector.shape_cast %139 : vector<8xf32> to vector<8x1xf32>
    %cst_56 = arith.constant 3.200000e+01 : f32
    %141 = vector.broadcast %cst_56 : f32 to vector<8x1xf32>
    %142 = arith.divf %140, %141 : vector<8x1xf32>
    %143 = vector.broadcast %142 : vector<8x1xf32> to vector<8x32xf32>
    %144 = arith.subf %136, %143 : vector<8x32xf32>
    %145 = arith.mulf %144, %144 : vector<8x32xf32>
    %cst_57 = arith.constant dense<0.000000e+00> : vector<8xf32>
    %146 = vector.multi_reduction <add>, %145, %cst_57 [1] : vector<8x32xf32> to vector<8xf32>
    %147 = vector.shape_cast %146 : vector<8xf32> to vector<8x1xf32>
    %cst_58 = arith.constant 0.0322580636 : f32
    %148 = vector.broadcast %cst_58 : f32 to vector<8x1xf32>
    %149 = arith.mulf %147, %148 : vector<8x1xf32>
    %150 = math.sqrt %149 : vector<8x1xf32>
    %151 = vector.broadcast %137 : vector<1x32xf32> to vector<8x32xf32>
    %152 = arith.mulf %151, %144 : vector<8x32xf32>
    %cst_59 = arith.constant 9.99999997E-7 : f32
    %153 = vector.broadcast %cst_59 : f32 to vector<8x1xf32>
    %154 = arith.addf %150, %153 : vector<8x1xf32>
    %155 = vector.broadcast %154 : vector<8x1xf32> to vector<8x32xf32>
    %156 = arith.divf %152, %155 : vector<8x32xf32>
    %157 = vector.broadcast %138 : vector<1x32xf32> to vector<8x32xf32>
    %158 = arith.addf %156, %157 : vector<8x32xf32>
    %c0_60 = arith.constant 0 : index
    %c0_61 = arith.constant 0 : index
    %c0_62 = arith.constant 0 : index
    %159 = vector.load %arg14[%c0_60, %c0_61, %c0_62] : memref<1x8x32xf32, #tpu.memory_space<vmem>>, vector<1x8x32xf32>
    %160 = vector.shape_cast %159 : vector<1x8x32xf32> to vector<8x32xf32>
    %161 = vector.shape_cast %158 : vector<8x32xf32> to vector<1x8x32xf32>
    tpu.vector_store %arg14[%c0_60, %c0_61, %c0_62], %161 {strides = array<i32>} : memref<1x8x32xf32, #tpu.memory_space<vmem>>, vector<1x8x32xf32>,
    return
  }
  func.func @transform_0(%arg0: i32) -> (i32, i32, i32) {
    %c0_i32 = arith.constant 0 : i32
    %c0_i32_0 = arith.constant 0 : i32
    %c0_i32_1 = arith.constant 0 : i32
    return %arg0, %c0_i32, %c0_i32_0 : i32, i32, i32
  }
  func.func @transform_1(%arg0: i32) -> (i32, i32) {
    %c0_i32 = arith.constant 0 : i32
    %c0_i32_0 = arith.constant 0 : i32
    %c0_i32_1 = arith.constant 0 : i32
    return %c0_i32, %c0_i32_0 : i32, i32
  }
  func.func @transform_2(%arg0: i32) -> (i32, i32) {
    %c0_i32 = arith.constant 0 : i32
    %c0_i32_0 = arith.constant 0 : i32
    %c0_i32_1 = arith.constant 0 : i32
    return %c0_i32, %c0_i32_0 : i32, i32
  }
  func.func @transform_3(%arg0: i32) -> (i32, i32) {
    %c0_i32 = arith.constant 0 : i32
    %c0_i32_0 = arith.constant 0 : i32
    %c0_i32_1 = arith.constant 0 : i32
    return %c0_i32, %c0_i32_0 : i32, i32
  }
  func.func @transform_4(%arg0: i32) -> (i32, i32) {
    %c0_i32 = arith.constant 0 : i32
    %c0_i32_0 = arith.constant 0 : i32
    %c0_i32_1 = arith.constant 0 : i32
    return %c0_i32, %c0_i32_0 : i32, i32
  }
  func.func @transform_5(%arg0: i32) -> (i32, i32) {
    %c0_i32 = arith.constant 0 : i32
    %c0_i32_0 = arith.constant 0 : i32
    %c0_i32_1 = arith.constant 0 : i32
    return %c0_i32, %c0_i32_0 : i32, i32
  }
  func.func @transform_6(%arg0: i32) -> (i32, i32) {
    %c0_i32 = arith.constant 0 : i32
    %c0_i32_0 = arith.constant 0 : i32
    %c0_i32_1 = arith.constant 0 : i32
    return %c0_i32, %c0_i32_0 : i32, i32
  }
  func.func @transform_7(%arg0: i32) -> (i32, i32) {
    %c0_i32 = arith.constant 0 : i32
    %c0_i32_0 = arith.constant 0 : i32
    %c0_i32_1 = arith.constant 0 : i32
    return %c0_i32, %c0_i32_0 : i32, i32
  }
  func.func @transform_8(%arg0: i32) -> (i32, i32) {
    %c0_i32 = arith.constant 0 : i32
    %c0_i32_0 = arith.constant 0 : i32
    %c0_i32_1 = arith.constant 0 : i32
    return %c0_i32, %c0_i32_0 : i32, i32
  }
  func.func @transform_9(%arg0: i32) -> (i32, i32) {
    %c0_i32 = arith.constant 0 : i32
    %c0_i32_0 = arith.constant 0 : i32
    %c0_i32_1 = arith.constant 0 : i32
    return %c0_i32, %c0_i32_0 : i32, i32
  }
  func.func @transform_10(%arg0: i32) -> (i32, i32) {
    %c0_i32 = arith.constant 0 : i32
    %c0_i32_0 = arith.constant 0 : i32
    %c0_i32_1 = arith.constant 0 : i32
    return %c0_i32, %c0_i32_0 : i32, i32
  }
  func.func @transform_11(%arg0: i32) -> (i32, i32) {
    %c0_i32 = arith.constant 0 : i32
    %c0_i32_0 = arith.constant 0 : i32
    %c0_i32_1 = arith.constant 0 : i32
    return %c0_i32, %c0_i32_0 : i32, i32
  }
  func.func @transform_12(%arg0: i32) -> (i32, i32) {
    %c0_i32 = arith.constant 0 : i32
    %c0_i32_0 = arith.constant 0 : i32
    %c0_i32_1 = arith.constant 0 : i32
    return %c0_i32, %c0_i32_0 : i32, i32
  }
  func.func @transform_13(%arg0: i32) -> (i32, i32, i32) {
    %c0_i32 = arith.constant 0 : i32
    %c0_i32_0 = arith.constant 0 : i32
    %c0_i32_1 = arith.constant 0 : i32
    return %arg0, %c0_i32, %c0_i32_0 : i32, i32, i32
  }
}

</mosaic_0001>

<llo_original>
// kernel: tpu_custom_call.1
$region0: #{tpu_custom_call.1}
  #allocation0 [shape = 'u32[]', space=smem, size = 0x4, offset = 0x4, fixed_abs, tag = 'smem constant byte address 0x4 - core index']
  #allocation1 [shape = 'u32[72,128]{1,0:T(1,128)}', space=vmem, size = 0x9000, scoped, tag = 'internal scratch']
  %s0 = inlined_call_operand.vmem [shape: f32[2,8,32], index: 0, kind: input, shape index: {}]
  %s1 = inlined_call_operand.vmem [shape: bf16[32,96], index: 1, kind: input, shape index: {}]
  %s2 = inlined_call_operand.vmem [shape: f32[1,96], index: 2, kind: input, shape index: {}]
  %s3 = inlined_call_operand.vmem [shape: bf16[32,32], index: 3, kind: input, shape index: {}]
  %s4 = inlined_call_operand.vmem [shape: f32[1,32], index: 4, kind: input, shape index: {}]
  %s5 = inlined_call_operand.vmem [shape: f32[1,32], index: 5, kind: input, shape index: {}]
  %s6 = inlined_call_operand.vmem [shape: f32[1,32], index: 6, kind: input, shape index: {}]
  %s7 = inlined_call_operand.vmem [shape: bf16[32,2048], index: 7, kind: input, shape index: {}]
  %s8 = inlined_call_operand.vmem [shape: f32[1,2048], index: 8, kind: input, shape index: {}]
  %s9 = inlined_call_operand.vmem [shape: bf16[2048,32], index: 9, kind: input, shape index: {}]
  %s10 = inlined_call_operand.vmem [shape: f32[1,32], index: 10, kind: input, shape index: {}]
  %s11 = inlined_call_operand.vmem [shape: f32[1,32], index: 11, kind: input, shape index: {}]
  %s12 = inlined_call_operand.vmem [shape: f32[1,32], index: 12, kind: input, shape index: {}]
  %s13 = inlined_call_operand.hbm [shape: f32[2,8,32], index: 13, kind: output, shape index: {}]
  %s14 = sld [smem:[#allocation0]]
  $region85: #{tpu_custom_call.1} parent=0
    _
  %s16 = ssub.s32 1, %s14
  %s17 = scalar_select 0, %s16, %s14
  $region1: #{tpu_custom_call.1} parent=0
    #allocation2 [shape = 'u8[8192]{0}', space=vmem, size = 0x2000, scoped, tag = 'output window, operand 0']
    #allocation3 [shape = 's32[2]{0}', space=sflag, size = 0x8, scoped, tag = 'scoped memory for tpu_custom_call.1']
    %18 = vsyncpa [#allocation3], 0
    %s19 = scalar_lea.sflag [#allocation3], 1
    %20 = vsyncpa %s19, 0
    loop: start=0, step=1, limit=4
    $region2: #{tpu_custom_call.1} parent=1 // loop_pre_header
      _
    $region3: #{tpu_custom_call.1} parent=1 // loop_header
      %s22 = sphi 0, %s26
      %p23 = scmp.ge.s32.totalorder %s22, 4
      %s32 = sphi 0, %s34
      %s35 = sphi 0, %s32
      %s36 = sphi 0, %s35
      %s52 = sphi 0, %s36
      %s56 = sphi 0, %s56
      %s58 = sphi 0, %s56
      %s59 = sphi 0, %s58
      %s73 = sphi 0, %s59
      %s77 = sphi 0, %s77
      %s79 = sphi 0, %s77
      %s80 = sphi 0, %s79
      %s94 = sphi 0, %s80
      %s98 = sphi 0, %s98
      %s100 = sphi 0, %s98
      %s101 = sphi 0, %s100
      %s115 = sphi 0, %s101
      %s119 = sphi 0, %s119
      %s121 = sphi 0, %s119
      %s122 = sphi 0, %s121
      %s136 = sphi 0, %s122
      %s140 = sphi 0, %s140
      %s142 = sphi 0, %s140
      %s143 = sphi 0, %s142
      %s157 = sphi 0, %s143
      %s161 = sphi 0, %s161
      %s163 = sphi 0, %s161
      %s164 = sphi 0, %s163
      %s178 = sphi 0, %s164
      %s182 = sphi 0, %s182
      %s184 = sphi 0, %s182
      %s185 = sphi 0, %s184
      %s199 = sphi 0, %s185
      %s203 = sphi 0, %s203
      %s205 = sphi 0, %s203
      %s206 = sphi 0, %s205
      %s220 = sphi 0, %s206
      %s224 = sphi 0, %s224
      %s226 = sphi 0, %s224
      %s227 = sphi 0, %s226
      %s241 = sphi 0, %s227
      %s245 = sphi 0, %s245
      %s247 = sphi 0, %s245
      %s248 = sphi 0, %s247
      %s262 = sphi 0, %s248
      %s266 = sphi 0, %s266
      %s268 = sphi 0, %s266
      %s269 = sphi 0, %s268
      %s283 = sphi 0, %s269
      %s287 = sphi 0, %s287
      %s289 = sphi 0, %s287
      %s290 = sphi 0, %s289
      %s304 = sphi 0, %s290
      %s310 = sphi 0, %s312
      %s313 = sphi 0, %s310
      %s314 = sphi 0, %s313
      %s330 = sphi 0, %s314
    $region4: #{tpu_custom_call.1} parent=1 // loop_header_branch
      %25 = sbr.rel (%p23) target = $region8
    $region5: #{tpu_custom_call.1} parent=1 // loop_body
      %s27 = ssub.s32 %s22, 1
      %s28 = ssub.s32 %s22, 2
      %s29 = sadd.s32 %s22, 1
      %s30 = ssub.s32 %s22, %s29
      %p31 = scmp.eq.s32.totalorder %s30, 0
      %s33 = sadd.s32 %s32, 1
      %s34 = scalar_select %p31, %s32, %s33
      %p37 = pneg %p31
      %p38 = scmp.eq.s32.totalorder %s22, 1
      %p39 = por %p37, %p38
      %p40 = scmp.ne.s32.totalorder %s32, %s35
      %p41 = scmp.eq.s32.totalorder %s22, 0
      %p42 = por %p40, %p41
      %p43 = scmp.ne.s32.totalorder %s32, %s35
      %p44 = scmp.eq.s32.totalorder %s27, 1
      %p45 = por %p43, %p44
      %p46 = scmp.ne.s32.totalorder %s35, %s36
      %p47 = scmp.eq.s32.totalorder %s27, 0
      %p48 = por %p46, %p47
      %p49 = scmp.ne.s32.totalorder %s35, %s36
      %p50 = scmp.eq.s32.totalorder %s28, 1
      %p51 = por %p49, %p50
      %p53 = scmp.ne.s32.totalorder %s36, %s52
      %p54 = scmp.eq.s32.totalorder %s28, 0
      %p55 = por %p53, %p54
      %s57 = sadd.s32 %s56, 1
      %p60 = scmp.eq.s32.totalorder %s22, 1
      %p61 = scmp.ne.s32.totalorder %s56, %s58
      %p62 = scmp.eq.s32.totalorder %s22, 0
      %p63 = por %p61, %p62
      %p64 = scmp.ne.s32.totalorder %s56, %s58
      %p65 = scmp.eq.s32.totalorder %s27, 1
      %p66 = por %p64, %p65
      %p67 = scmp.ne.s32.totalorder %s58, %s59
      %p68 = scmp.eq.s32.totalorder %s27, 0
      %p69 = por %p67, %p68
      %p70 = scmp.ne.s32.totalorder %s58, %s59
      %p71 = scmp.eq.s32.totalorder %s28, 1
      %p72 = por %p70, %p71
      %p74 = scmp.ne.s32.totalorder %s59, %s73
      %p75 = scmp.eq.s32.totalorder %s28, 0
      %p76 = por %p74, %p75
      %s78 = sadd.s32 %s77, 1
      %p81 = scmp.eq.s32.totalorder %s22, 1
      %p82 = scmp.ne.s32.totalorder %s77, %s79
      %p83 = scmp.eq.s32.totalorder %s22, 0
      %p84 = por %p82, %p83
      %p85 = scmp.ne.s32.totalorder %s77, %s79
      %p86 = scmp.eq.s32.totalorder %s27, 1
      %p87 = por %p85, %p86
      %p88 = scmp.ne.s32.totalorder %s79, %s80
      %p89 = scmp.eq.s32.totalorder %s27, 0
      %p90 = por %p88, %p89
      %p91 = scmp.ne.s32.totalorder %s79, %s80
      %p92 = scmp.eq.s32.totalorder %s28, 1
      %p93 = por %p91, %p92
      %p95 = scmp.ne.s32.totalorder %s80, %s94
      %p96 = scmp.eq.s32.totalorder %s28, 0
      %p97 = por %p95, %p96
      %s99 = sadd.s32 %s98, 1
      %p102 = scmp.eq.s32.totalorder %s22, 1
      %p103 = scmp.ne.s32.totalorder %s98, %s100
      %p104 = scmp.eq.s32.totalorder %s22, 0
      %p105 = por %p103, %p104
      %p106 = scmp.ne.s32.totalorder %s98, %s100
      %p107 = scmp.eq.s32.totalorder %s27, 1
      %p108 = por %p106, %p107
      %p109 = scmp.ne.s32.totalorder %s100, %s101
      %p110 = scmp.eq.s32.totalorder %s27, 0
      %p111 = por %p109, %p110
      %p112 = scmp.ne.s32.totalorder %s100, %s101
      %p113 = scmp.eq.s32.totalorder %s28, 1
      %p114 = por %p112, %p113
      %p116 = scmp.ne.s32.totalorder %s101, %s115
      %p117 = scmp.eq.s32.totalorder %s28, 0
      %p118 = por %p116, %p117
      %s120 = sadd.s32 %s119, 1
      %p123 = scmp.eq.s32.totalorder %s22, 1
      %p124 = scmp.ne.s32.totalorder %s119, %s121
      %p125 = scmp.eq.s32.totalorder %s22, 0
      %p126 = por %p124, %p125
      %p127 = scmp.ne.s32.totalorder %s119, %s121
      %p128 = scmp.eq.s32.totalorder %s27, 1
      %p129 = por %p127, %p128
      %p130 = scmp.ne.s32.totalorder %s121, %s122
      %p131 = scmp.eq.s32.totalorder %s27, 0
      %p132 = por %p130, %p131
      %p133 = scmp.ne.s32.totalorder %s121, %s122
      %p134 = scmp.eq.s32.totalorder %s28, 1
      %p135 = por %p133, %p134
      %p137 = scmp.ne.s32.totalorder %s122, %s136
      %p138 = scmp.eq.s32.totalorder %s28, 0
      %p139 = por %p137, %p138
      %s141 = sadd.s32 %s140, 1
      %p144 = scmp.eq.s32.totalorder %s22, 1
      %p145 = scmp.ne.s32.totalorder %s140, %s142
      %p146 = scmp.eq.s32.totalorder %s22, 0
      %p147 = por %p145, %p146
      %p148 = scmp.ne.s32.totalorder %s140, %s142
      %p149 = scmp.eq.s32.totalorder %s27, 1
      %p150 = por %p148, %p149
      %p151 = scmp.ne.s32.totalorder %s142, %s143
      %p152 = scmp.eq.s32.totalorder %s27, 0
      %p153 = por %p151, %p152
      %p154 = scmp.ne.s32.totalorder %s142, %s143
      %p155 = scmp.eq.s32.totalorder %s28, 1
      %p156 = por %p154, %p155
      %p158 = scmp.ne.s32.totalorder %s143, %s157
      %p159 = scmp.eq.s32.totalorder %s28, 0
      %p160 = por %p158, %p159
      %s162 = sadd.s32 %s161, 1
      %p165 = scmp.eq.s32.totalorder %s22, 1
      %p166 = scmp.ne.s32.totalorder %s161, %s163
      %p167 = scmp.eq.s32.totalorder %s22, 0
      %p168 = por %p166, %p167
      %p169 = scmp.ne.s32.totalorder %s161, %s163
      %p170 = scmp.eq.s32.totalorder %s27, 1
      %p171 = por %p169, %p170
      %p172 = scmp.ne.s32.totalorder %s163, %s164
      %p173 = scmp.eq.s32.totalorder %s27, 0
      %p174 = por %p172, %p173
      %p175 = scmp.ne.s32.totalorder %s163, %s164
      %p176 = scmp.eq.s32.totalorder %s28, 1
      %p177 = por %p175, %p176
      %p179 = scmp.ne.s32.totalorder %s164, %s178
      %p180 = scmp.eq.s32.totalorder %s28, 0
      %p181 = por %p179, %p180
      %s183 = sadd.s32 %s182, 1
      %p186 = scmp.eq.s32.totalorder %s22, 1
      %p187 = scmp.ne.s32.totalorder %s182, %s184
      %p188 = scmp.eq.s32.totalorder %s22, 0
      %p189 = por %p187, %p188
      %p190 = scmp.ne.s32.totalorder %s182, %s184
      %p191 = scmp.eq.s32.totalorder %s27, 1
      %p192 = por %p190, %p191
      %p193 = scmp.ne.s32.totalorder %s184, %s185
      %p194 = scmp.eq.s32.totalorder %s27, 0
      %p195 = por %p193, %p194
      %p196 = scmp.ne.s32.totalorder %s184, %s185
      %p197 = scmp.eq.s32.totalorder %s28, 1
      %p198 = por %p196, %p197
      %p200 = scmp.ne.s32.totalorder %s185, %s199
      %p201 = scmp.eq.s32.totalorder %s28, 0
      %p202 = por %p200, %p201
      %s204 = sadd.s32 %s203, 1
      %p207 = scmp.eq.s32.totalorder %s22, 1
      %p208 = scmp.ne.s32.totalorder %s203, %s205
      %p209 = scmp.eq.s32.totalorder %s22, 0
      %p210 = por %p208, %p209
      %p211 = scmp.ne.s32.totalorder %s203, %s205
      %p212 = scmp.eq.s32.totalorder %s27, 1
      %p213 = por %p211, %p212
      %p214 = scmp.ne.s32.totalorder %s205, %s206
      %p215 = scmp.eq.s32.totalorder %s27, 0
      %p216 = por %p214, %p215
      %p217 = scmp.ne.s32.totalorder %s205, %s206
      %p218 = scmp.eq.s32.totalorder %s28, 1
      %p219 = por %p217, %p218
      %p221 = scmp.ne.s32.totalorder %s206, %s220
      %p222 = scmp.eq.s32.totalorder %s28, 0
      %p223 = por %p221, %p222
      %s225 = sadd.s32 %s224, 1
      %p228 = scmp.eq.s32.totalorder %s22, 1
      %p229 = scmp.ne.s32.totalorder %s224, %s226
      %p230 = scmp.eq.s32.totalorder %s22, 0
      %p231 = por %p229, %p230
      %p232 = scmp.ne.s32.totalorder %s224, %s226
      %p233 = scmp.eq.s32.totalorder %s27, 1
      %p234 = por %p232, %p233
      %p235 = scmp.ne.s32.totalorder %s226, %s227
      %p236 = scmp.eq.s32.totalorder %s27, 0
      %p237 = por %p235, %p236
      %p238 = scmp.ne.s32.totalorder %s226, %s227
      %p239 = scmp.eq.s32.totalorder %s28, 1
      %p240 = por %p238, %p239
      %p242 = scmp.ne.s32.totalorder %s227, %s241
      %p243 = scmp.eq.s32.totalorder %s28, 0
      %p244 = por %p242, %p243
      %s246 = sadd.s32 %s245, 1
      %p249 = scmp.eq.s32.totalorder %s22, 1
      %p250 = scmp.ne.s32.totalorder %s245, %s247
      %p251 = scmp.eq.s32.totalorder %s22, 0
      %p252 = por %p250, %p251
      %p253 = scmp.ne.s32.totalorder %s245, %s247
      %p254 = scmp.eq.s32.totalorder %s27, 1
      %p255 = por %p253, %p254
      %p256 = scmp.ne.s32.totalorder %s247, %s248
      %p257 = scmp.eq.s32.totalorder %s27, 0
      %p258 = por %p256, %p257
      %p259 = scmp.ne.s32.totalorder %s247, %s248
      %p260 = scmp.eq.s32.totalorder %s28, 1
      %p261 = por %p259, %p260
      %p263 = scmp.ne.s32.totalorder %s248, %s262
      %p264 = scmp.eq.s32.totalorder %s28, 0
      %p265 = por %p263, %p264
      %s267 = sadd.s32 %s266, 1
      %p270 = scmp.eq.s32.totalorder %s22, 1
      %p271 = scmp.ne.s32.totalorder %s266, %s268
      %p272 = scmp.eq.s32.totalorder %s22, 0
      %p273 = por %p271, %p272
      %p274 = scmp.ne.s32.totalorder %s266, %s268
      %p275 = scmp.eq.s32.totalorder %s27, 1
      %p276 = por %p274, %p275
      %p277 = scmp.ne.s32.totalorder %s268, %s269
      %p278 = scmp.eq.s32.totalorder %s27, 0
      %p279 = por %p277, %p278
      %p280 = scmp.ne.s32.totalorder %s268, %s269
      %p281 = scmp.eq.s32.totalorder %s28, 1
      %p282 = por %p280, %p281
      %p284 = scmp.ne.s32.totalorder %s269, %s283
      %p285 = scmp.eq.s32.totalorder %s28, 0
      %p286 = por %p284, %p285
      %s288 = sadd.s32 %s287, 1
      %p291 = scmp.eq.s32.totalorder %s22, 1
      %p292 = scmp.ne.s32.totalorder %s287, %s289
      %p293 = scmp.eq.s32.totalorder %s22, 0
      %p294 = por %p292, %p293
      %p295 = scmp.ne.s32.totalorder %s287, %s289
      %p296 = scmp.eq.s32.totalorder %s27, 1
      %p297 = por %p295, %p296
      %p298 = scmp.ne.s32.totalorder %s289, %s290
      %p299 = scmp.eq.s32.totalorder %s27, 0
      %p300 = por %p298, %p299
      %p301 = scmp.ne.s32.totalorder %s289, %s290
      %p302 = scmp.eq.s32.totalorder %s28, 1
      %p303 = por %p301, %p302
      %p305 = scmp.ne.s32.totalorder %s290, %s304
      %p306 = scmp.eq.s32.totalorder %s28, 0
      %p307 = por %p305, %p306
      %s308 = ssub.s32 %s22, %s29
      %p309 = scmp.eq.s32.totalorder %s308, 0
      %s311 = sadd.s32 %s310, 1
      %s312 = scalar_select %p309, %s310, %s311
      %p315 = pneg %p309
      %p316 = scmp.eq.s32.totalorder %s22, 1
      %p317 = por %p315, %p316
      %p318 = scmp.ne.s32.totalorder %s310, %s313
      %p319 = scmp.eq.s32.totalorder %s22, 0
      %p320 = por %p318, %p319
      %p321 = scmp.ne.s32.totalorder %s310, %s313
      %p322 = scmp.eq.s32.totalorder %s27, 1
      %p323 = por %p321, %p322
      %p324 = scmp.ne.s32.totalorder %s313, %s314
      %p325 = scmp.eq.s32.totalorder %s27, 0
      %p326 = por %p324, %p325
      %p327 = scmp.ne.s32.totalorder %s313, %s314
      %p328 = scmp.eq.s32.totalorder %s28, 1
      %p329 = por %p327, %p328
      %p331 = scmp.ne.s32.totalorder %s314, %s330
      %p332 = scmp.eq.s32.totalorder %s28, 0
      %p333 = por %p331, %p332
      %p334 = scmp.le.s32.totalorder 1, %s22
      %p335 = scmp.lt.s32.totalorder %s22, 3
      %p336 = pnand %p334, %p335
      %p337 = pneg %p336
      // Predicated region
      $region9: #{tpu_custom_call.1} parent=5 // pred_check
        _
      $region10: #{tpu_custom_call.1} parent=5 // pred_check_branch
        %339 = sbr.rel (%p336) target = $region12
      $region11: #{tpu_custom_call.1} parent=5 // pred_region
        %s340 = ssub.s32 %s22, 1
        // Predicated region
        $region13: #{tpu_custom_call.1} parent=11 // pred_check
          %p341 = pneg %p69
        $region14: #{tpu_custom_call.1} parent=11 // pred_check_branch
          %343 = sbr.rel (%p341) target = $region16
        $region15: #{tpu_custom_call.1} parent=11 // pred_region
          _
        $region16: #{tpu_custom_call.1} parent=11 // pred_fallthru
          _
        // Predicated region
        $region17: #{tpu_custom_call.1} parent=11 // pred_check
          %p344 = pneg %p90
        $region18: #{tpu_custom_call.1} parent=11 // pred_check_branch
          %346 = sbr.rel (%p344) target = $region20
        $region19: #{tpu_custom_call.1} parent=11 // pred_region
          _
        $region20: #{tpu_custom_call.1} parent=11 // pred_fallthru
          _
        // Predicated region
        $region21: #{tpu_custom_call.1} parent=11 // pred_check
          %p347 = pneg %p111
        $region22: #{tpu_custom_call.1} parent=11 // pred_check_branch
          %349 = sbr.rel (%p347) target = $region24
        $region23: #{tpu_custom_call.1} parent=11 // pred_region
          _
        $region24: #{tpu_custom_call.1} parent=11 // pred_fallthru
          _
        // Predicated region
        $region25: #{tpu_custom_call.1} parent=11 // pred_check
          %p350 = pneg %p132
        $region26: #{tpu_custom_call.1} parent=11 // pred_check_branch
          %352 = sbr.rel (%p350) target = $region28
        $region27: #{tpu_custom_call.1} parent=11 // pred_region
          _
        $region28: #{tpu_custom_call.1} parent=11 // pred_fallthru
          _
        // Predicated region
        $region29: #{tpu_custom_call.1} parent=11 // pred_check
          %p353 = pneg %p153
        $region30: #{tpu_custom_call.1} parent=11 // pred_check_branch
          %355 = sbr.rel (%p353) target = $region32
        $region31: #{tpu_custom_call.1} parent=11 // pred_region
          _
        $region32: #{tpu_custom_call.1} parent=11 // pred_fallthru
          _
        // Predicated region
        $region33: #{tpu_custom_call.1} parent=11 // pred_check
          %p356 = pneg %p174
        $region34: #{tpu_custom_call.1} parent=11 // pred_check_branch
          %358 = sbr.rel (%p356) target = $region36
        $region35: #{tpu_custom_call.1} parent=11 // pred_region
          _
        $region36: #{tpu_custom_call.1} parent=11 // pred_fallthru
          _
        // Predicated region
        $region37: #{tpu_custom_call.1} parent=11 // pred_check
          %p359 = pneg %p195
        $region38: #{tpu_custom_call.1} parent=11 // pred_check_branch
          %361 = sbr.rel (%p359) target = $region40
        $region39: #{tpu_custom_call.1} parent=11 // pred_region
          _
        $region40: #{tpu_custom_call.1} parent=11 // pred_fallthru
          _
        // Predicated region
        $region41: #{tpu_custom_call.1} parent=11 // pred_check
          %p362 = pneg %p216
        $region42: #{tpu_custom_call.1} parent=11 // pred_check_branch
          %364 = sbr.rel (%p362) target = $region44
        $region43: #{tpu_custom_call.1} parent=11 // pred_region
          _
        $region44: #{tpu_custom_call.1} parent=11 // pred_fallthru
          _
        // Predicated region
        $region45: #{tpu_custom_call.1} parent=11 // pred_check
          %p365 = pneg %p237
        $region46: #{tpu_custom_call.1} parent=11 // pred_check_branch
          %367 = sbr.rel (%p365) target = $region48
        $region47: #{tpu_custom_call.1} parent=11 // pred_region
          _
        $region48: #{tpu_custom_call.1} parent=11 // pred_fallthru
          _
        // Predicated region
        $region49: #{tpu_custom_call.1} parent=11 // pred_check
          %p368 = pneg %p258
        $region50: #{tpu_custom_call.1} parent=11 // pred_check_branch
          %370 = sbr.rel (%p368) target = $region52
        $region51: #{tpu_custom_call.1} parent=11 // pred_region
          _
        $region52: #{tpu_custom_call.1} parent=11 // pred_fallthru
          _
        // Predicated region
        $region53: #{tpu_custom_call.1} parent=11 // pred_check
          %p371 = pneg %p279
        $region54: #{tpu_custom_call.1} parent=11 // pred_check_branch
          %373 = sbr.rel (%p371) target = $region56
        $region55: #{tpu_custom_call.1} parent=11 // pred_region
          _
        $region56: #{tpu_custom_call.1} parent=11 // pred_fallthru
          _
        // Predicated region
        $region57: #{tpu_custom_call.1} parent=11 // pred_check
          %p374 = pneg %p300
        $region58: #{tpu_custom_call.1} parent=11 // pred_check_branch
          %376 = sbr.rel (%p374) target = $region60
        $region59: #{tpu_custom_call.1} parent=11 // pred_region
          _
        $region60: #{tpu_custom_call.1} parent=11 // pred_fallthru
          _
      $region12: #{tpu_custom_call.1} parent=5 // pred_fallthru
        _
      %p377 = scmp.lt.s32.totalorder %s22, 2
      // Predicated region
      $region61: #{tpu_custom_call.1} parent=5 // pred_check
        %p378 = pneg %p377
      $region62: #{tpu_custom_call.1} parent=5 // pred_check_branch
        %380 = sbr.rel (%p378) target = $region64
      $region63: #{tpu_custom_call.1} parent=5 // pred_region
        // Predicated region
        $region65: #{tpu_custom_call.1} parent=63 // pred_check
          %p381 = pneg %p42
        $region66: #{tpu_custom_call.1} parent=63 // pred_check_branch
          %383 = sbr.rel (%p381) target = $region68
        $region67: #{tpu_custom_call.1} parent=63 // pred_region
          %p384 = scmp.lt.s32.totalorder %s22, 1
          %s385 = scalar_select %p384, %s22, 1
          %s386 = smul.addr %s385, 8
          %s387 = scalar_lea.vmem %s0, %s386
        $region68: #{tpu_custom_call.1} parent=63 // pred_fallthru
          _
      $region64: #{tpu_custom_call.1} parent=5 // pred_fallthru
        _
      %p388 = scmp.le.s32.totalorder 1, %s22
      %p389 = scmp.lt.s32.totalorder %s22, 3
      %p390 = pnand %p388, %p389
      %p391 = pneg %p390
      // Predicated region
      $region69: #{tpu_custom_call.1} parent=5 // pred_check
        _
      $region70: #{tpu_custom_call.1} parent=5 // pred_check_branch
        %393 = sbr.rel (%p390) target = $region72
      $region71: #{tpu_custom_call.1} parent=5 // pred_region
        %s394 = ssub.s32 %s22, 1
        %p395 = scmp.lt.s32.totalorder %s27, 1
        %s396 = scalar_select %p395, %s27, 1
        %s397 = smul.addr %s396, 8
        %s398 = scalar_lea.vmem %s0, %s397
        %p399 = pneg %p48
        %p400 = pneg %p45
        %p401 = pneg %p69
        %p402 = pneg %p66
        %p403 = pneg %p90
        %p404 = pneg %p87
        %p405 = pneg %p111
        %p406 = pneg %p108
        %p407 = pneg %p132
        %p408 = pneg %p129
        %p409 = pneg %p153
        %p410 = pneg %p150
        %p411 = pneg %p174
        %p412 = pneg %p171
        %p413 = pneg %p195
        %p414 = pneg %p192
        %p415 = pneg %p216
        %p416 = pneg %p213
        %p417 = pneg %p237
        %p418 = pneg %p234
        %p419 = pneg %p258
        %p420 = pneg %p255
        %p421 = pneg %p279
        %p422 = pneg %p276
        %p423 = pneg %p300
        %p424 = pneg %p297
        %p425 = pneg %p326
        %p426 = pneg %p323
        %s427 = sand.u32 %s313, 1
        %s428 = scalar_lea.sflag [#allocation3], %s427
        %s429 = sand.u32 %s313, 1
        %s430 = smul.addr %s429, 8
        %s431 = scalar_lea.vmem [#allocation2], %s430
        %p432 = scmp.lt.s32.totalorder %s27, 1
        %s433 = scalar_select %p432, %s27, 1
        %s434 = smul.addr %s433, 8
        %s435 = scalar_lea.vmem %s0, %s434
        %v437 = vld [vmem:[%s435] sm:$0xff]
        %v438 = vpack.c.bf16 %v437, %v437
        %v439 = vld [vmem:[%s1] sm:$0xf]
        %v440 = vld [vmem:[%s1 + $0x4] sm:$0xf]
        %v441 = vld [vmem:[%s1 + $0x8] sm:$0xf]
        %v442 = vld [vmem:[%s1 + $0xc] sm:$0xf]
        %v443 = vld [vmem:[%s2] sm:$0x1]
        %v445 = vperm.slane %v443, 0
        %v451 = vunpack.c.l.b16 %v439
        %v452 = vunpack.c.l.b16 %v440
        %v453 = vunpack.c.l.b16 %v441
        %v454 = vunpack.c.l.b16 %v442
        %v455 = vpack.c.b16 %v452, %v451
        %v456 = vpack.c.b16 %v454, %v453
        %vm459 = vcmask 261120
        %v461 = vsel %vm459, %v438, 0
        %463 = vmatpush.bf16.msra.mxu0 0
        %464 = vmatpush.bf16.msra.mxu0 0
        %465 = vmatpush.bf16.msra.mxu0 0
        %466 = vmatpush.bf16.msra.mxu0 0
        %467 = vmatpush.bf16.msra.mxu0 0
        %468 = vmatpush.bf16.msra.mxu0 0
        %469 = vmatpush.bf16.msra.mxu0 %v456
        %470 = vmatpush.bf16.msra.mxu0 %v455
        %471 = vmatmul.bf16.gmra.mxu0 %v461
        %v472 = vpop.f32.mrf.mxu0
        %v473 = vadd.f32 %v445, %v472
        %v474 = vpop.f32.mrf.mxu0
        %475 = vdwg.mxu0
        %v476 = vmul.f32 %v473, 0.35355338
        %v477 = vpack.c.bf16 %v476, %v476
        %v478 = vpack.c.bf16 %v473, %v473
        %480 = vrot.lane.b32.xlu0 %v478, 96
        %v481 = vpop.permute.xlu0 %480
        %vm482 = vcmask 64512
        %v484 = vsel %vm482, %v477, 0
        %v487 = vsel %vm482, %v481, 0
        %489 = vmatpush.bf16.xpose.msra.mxu0 0
        %490 = vmatpush.bf16.xpose.msra.mxu0 0
        %491 = vmatpush.bf16.xpose.msra.mxu0 0
        %492 = vmatpush.bf16.xpose.msra.mxu0 0
        %493 = vmatpush.bf16.xpose.msra.mxu0 0
        %494 = vmatpush.bf16.xpose.msra.mxu0 0
        %495 = vmatpush.bf16.xpose.msra.mxu0 0
        %496 = vmatpush.bf16.xpose.msra.mxu0 %v487
        %497 = vmatmul.bf16.gmra.mxu0 %v484
        %v498 = vpop.f32.mrf.mxu0
        %v499 = vadd.f32 0.0, %v498
        %v500 = vpop.f32.mrf.mxu0
        %501 = vdwg.mxu0
        %v502 = vsel %vm482, %v499, -inf
        %503 = vmax.xlane.f32.xlu0 %v502
        %v504 = vpop.xlane.xlu0 %503
        %v505 = vsub.f32 %v499, %v504
        %v506 = vmul.f32 %v505, 1.442695
        %v507 = vpow.pop %v506
        %v508 = vsel %vm482, %v507, 0.0
        %509 = vadd.xlane.f32.xlu0 %v508
        %v510 = vpop.xlane.xlu0 %509
        %v511 = vrcp.pop %v510
        %v512 = vmul.f32 %v507, %v511
        %v513 = vpack.c.bf16 %v512, %v512
        %514 = vrot.lane.b32.xlu0 %v478, 64
        %v515 = vpop.permute.xlu0 %514
        %v517 = vsel %vm482, %v513, 0
        %vm519 = vcmask 1043456
        %v521 = vsel %vm519, %v515, 0
        %523 = vmatpush.bf16.msra.mxu0 0
        %524 = vmatpush.bf16.msra.mxu0 0
        %525 = vmatpush.bf16.msra.mxu0 0
        %526 = vmatpush.bf16.msra.mxu0 0
        %527 = vmatpush.bf16.msra.mxu0 0
        %528 = vmatpush.bf16.msra.mxu0 0
        %529 = vmatpush.bf16.msra.mxu0 0
        %530 = vmatpush.bf16.msra.mxu0 %v521
        %531 = vmatmul.bf16.gmra.mxu0 %v517
        %v532 = vpop.f32.mrf.mxu0
        %v533 = vadd.f32 0.0, %v532
        %v534 = vpop.f32.mrf.mxu0
        %535 = vdwg.mxu0
        %537 = vrot.lane.b32.xlu0 %v477, 120
        %v538 = vpop.permute.xlu0 %537
        %539 = vrot.lane.b32.xlu0 %v478, 88
        %v540 = vpop.permute.xlu0 %539
        %v542 = vsel %vm482, %v538, 0
        %v545 = vsel %vm482, %v540, 0
        %547 = vmatpush.bf16.xpose.msra.mxu0 0
        %548 = vmatpush.bf16.xpose.msra.mxu0 0
        %549 = vmatpush.bf16.xpose.msra.mxu0 0
        %550 = vmatpush.bf16.xpose.msra.mxu0 0
        %551 = vmatpush.bf16.xpose.msra.mxu0 0
        %552 = vmatpush.bf16.xpose.msra.mxu0 0
        %553 = vmatpush.bf16.xpose.msra.mxu0 0
        %554 = vmatpush.bf16.xpose.msra.mxu0 %v545
        %555 = vmatmul.bf16.gmra.mxu0 %v542
        %v556 = vpop.f32.mrf.mxu0
        %v557 = vadd.f32 0.0, %v556
        %v558 = vpop.f32.mrf.mxu0
        %559 = vdwg.mxu0
        %v560 = vsel %vm482, %v557, -inf
        %561 = vmax.xlane.f32.xlu0 %v560
        %v562 = vpop.xlane.xlu0 %561
        %v563 = vsub.f32 %v557, %v562
        %v564 = vmul.f32 %v563, 1.442695
        %v565 = vpow.pop %v564
        %v566 = vsel %vm482, %v565, 0.0
        %567 = vadd.xlane.f32.xlu0 %v566
        %v568 = vpop.xlane.xlu0 %567
        %v569 = vrcp.pop %v568
        %v570 = vmul.f32 %v565, %v569
        %v571 = vpack.c.bf16 %v570, %v570
        %572 = vrot.lane.b32.xlu0 %v478, 56
        %v573 = vpop.permute.xlu0 %572
        %v575 = vsel %vm482, %v571, 0
        %v578 = vsel %vm519, %v573, 0
        %580 = vmatpush.bf16.msra.mxu0 0
        %581 = vmatpush.bf16.msra.mxu0 0
        %582 = vmatpush.bf16.msra.mxu0 0
        %583 = vmatpush.bf16.msra.mxu0 0
        %584 = vmatpush.bf16.msra.mxu0 0
        %585 = vmatpush.bf16.msra.mxu0 0
        %586 = vmatpush.bf16.msra.mxu0 0
        %587 = vmatpush.bf16.msra.mxu0 %v578
        %588 = vmatmul.bf16.gmra.mxu0 %v575
        %v589 = vpop.f32.mrf.mxu0
        %v590 = vadd.f32 0.0, %v589
        %v591 = vpop.f32.mrf.mxu0
        %592 = vdwg.mxu0
        %593 = vrot.lane.b32.xlu0 %v477, 112
        %v594 = vpop.permute.xlu0 %593
        %595 = vrot.lane.b32.xlu0 %v478, 80
        %v596 = vpop.permute.xlu0 %595
        %v598 = vsel %vm482, %v594, 0
        %v601 = vsel %vm482, %v596, 0
        %603 = vmatpush.bf16.xpose.msra.mxu0 0
        %604 = vmatpush.bf16.xpose.msra.mxu0 0
        %605 = vmatpush.bf16.xpose.msra.mxu0 0
        %606 = vmatpush.bf16.xpose.msra.mxu0 0
        %607 = vmatpush.bf16.xpose.msra.mxu0 0
        %608 = vmatpush.bf16.xpose.msra.mxu0 0
        %609 = vmatpush.bf16.xpose.msra.mxu0 0
        %610 = vmatpush.bf16.xpose.msra.mxu0 %v601
        %611 = vmatmul.bf16.gmra.mxu0 %v598
        %v612 = vpop.f32.mrf.mxu0
        %v613 = vadd.f32 0.0, %v612
        %v614 = vpop.f32.mrf.mxu0
        %615 = vdwg.mxu0
        %v616 = vsel %vm482, %v613, -inf
        %617 = vmax.xlane.f32.xlu0 %v616
        %v618 = vpop.xlane.xlu0 %617
        %v619 = vsub.f32 %v613, %v618
        %v620 = vmul.f32 %v619, 1.442695
        %v621 = vpow.pop %v620
        %v622 = vsel %vm482, %v621, 0.0
        %623 = vadd.xlane.f32.xlu0 %v622
        %v624 = vpop.xlane.xlu0 %623
        %v625 = vrcp.pop %v624
        %v626 = vmul.f32 %v621, %v625
        %v627 = vpack.c.bf16 %v626, %v626
        %628 = vrot.lane.b32.xlu0 %v478, 48
        %v629 = vpop.permute.xlu0 %628
        %v631 = vsel %vm482, %v627, 0
        %v634 = vsel %vm519, %v629, 0
        %636 = vmatpush.bf16.msra.mxu0 0
        %637 = vmatpush.bf16.msra.mxu0 0
        %638 = vmatpush.bf16.msra.mxu0 0
        %639 = vmatpush.bf16.msra.mxu0 0
        %640 = vmatpush.bf16.msra.mxu0 0
        %641 = vmatpush.bf16.msra.mxu0 0
        %642 = vmatpush.bf16.msra.mxu0 0
        %643 = vmatpush.bf16.msra.mxu0 %v634
        %644 = vmatmul.bf16.gmra.mxu0 %v631
        %v645 = vpop.f32.mrf.mxu0
        %v646 = vadd.f32 0.0, %v645
        %v647 = vpop.f32.mrf.mxu0
        %648 = vdwg.mxu0
        %649 = vrot.lane.b32.xlu0 %v477, 104
        %v650 = vpop.permute.xlu0 %649
        %651 = vrot.lane.b32.xlu0 %v478, 72
        %v652 = vpop.permute.xlu0 %651
        %v654 = vsel %vm482, %v650, 0
        %v657 = vsel %vm482, %v652, 0
        %659 = vmatpush.bf16.xpose.msra.mxu0 0
        %660 = vmatpush.bf16.xpose.msra.mxu0 0
        %661 = vmatpush.bf16.xpose.msra.mxu0 0
        %662 = vmatpush.bf16.xpose.msra.mxu0 0
        %663 = vmatpush.bf16.xpose.msra.mxu0 0
        %664 = vmatpush.bf16.xpose.msra.mxu0 0
        %665 = vmatpush.bf16.xpose.msra.mxu0 0
        %666 = vmatpush.bf16.xpose.msra.mxu0 %v657
        %667 = vmatmul.bf16.gmra.mxu0 %v654
        %v668 = vpop.f32.mrf.mxu0
        %v669 = vadd.f32 0.0, %v668
        %v670 = vpop.f32.mrf.mxu0
        %671 = vdwg.mxu0
        %v672 = vsel %vm482, %v669, -inf
        %673 = vmax.xlane.f32.xlu0 %v672
        %v674 = vpop.xlane.xlu0 %673
        %v675 = vsub.f32 %v669, %v674
        %v676 = vmul.f32 %v675, 1.442695
        %v677 = vpow.pop %v676
        %v678 = vsel %vm482, %v677, 0.0
        %679 = vadd.xlane.f32.xlu0 %v678
        %v680 = vpop.xlane.xlu0 %679
        %v681 = vrcp.pop %v680
        %v682 = vmul.f32 %v677, %v681
        %v683 = vpack.c.bf16 %v682, %v682
        %684 = vrot.lane.b32.xlu0 %v478, 40
        %v685 = vpop.permute.xlu0 %684
        %v687 = vsel %vm482, %v683, 0
        %v690 = vsel %vm519, %v685, 0
        %692 = vmatpush.bf16.msra.mxu0 0
        %693 = vmatpush.bf16.msra.mxu0 0
        %694 = vmatpush.bf16.msra.mxu0 0
        %695 = vmatpush.bf16.msra.mxu0 0
        %696 = vmatpush.bf16.msra.mxu0 0
        %697 = vmatpush.bf16.msra.mxu0 0
        %698 = vmatpush.bf16.msra.mxu0 0
        %699 = vmatpush.bf16.msra.mxu0 %v690
        %700 = vmatmul.bf16.gmra.mxu0 %v687
        %v701 = vpop.f32.mrf.mxu0
        %v702 = vadd.f32 0.0, %v701
        %v703 = vpop.f32.mrf.mxu0
        %704 = vdwg.mxu0
        %706 = vrot.lane.b32.xlu0 %v590, 8
        %v707 = vpop.permute.xlu0 %706
        %710 = vrot.lane.b32.xlu0 %v646, 16
        %v711 = vpop.permute.xlu0 %710
        %714 = vrot.lane.b32.xlu0 %v702, 24
        %v715 = vpop.permute.xlu0 %714
        %v717 = vsel %vm482, %v533, %v707
        %vm718 = vcmask 130048
        %v719 = vsel %vm718, %v717, %v711
        %vm720 = vcmask 195584
        %v721 = vsel %vm720, %v719, %v715
        %v722 = vpack.c.bf16 %v721, %v721
        %v723 = vld [vmem:[%s3] sm:$0xf]
        %v724 = vld [vmem:[%s3 + $0x4] sm:$0xf]
        %v725 = vld [vmem:[%s3 + $0x8] sm:$0xf]
        %v726 = vld [vmem:[%s3 + $0xc] sm:$0xf]
        %v727 = vld [vmem:[%s4] sm:$0x1]
        %v729 = vperm.slane %v727, 0
        %v735 = vunpack.c.l.b16 %v723
        %v736 = vunpack.c.l.b16 %v724
        %v737 = vunpack.c.l.b16 %v725
        %v738 = vunpack.c.l.b16 %v726
        %v739 = vpack.c.b16 %v736, %v735
        %v740 = vpack.c.b16 %v738, %v737
        %v744 = vsel %vm459, %v722, 0
        %746 = vmatpush.bf16.msra.mxu0 0
        %747 = vmatpush.bf16.msra.mxu0 0
        %748 = vmatpush.bf16.msra.mxu0 0
        %749 = vmatpush.bf16.msra.mxu0 0
        %750 = vmatpush.bf16.msra.mxu0 0
        %751 = vmatpush.bf16.msra.mxu0 0
        %752 = vmatpush.bf16.msra.mxu0 %v740
        %753 = vmatpush.bf16.msra.mxu0 %v739
        %754 = vmatmul.bf16.gmra.mxu0 %v744
        %v755 = vpop.f32.mrf.mxu0
        %v756 = vadd.f32 %v729, %v755
        %v757 = vpop.f32.mrf.mxu0
        %758 = vdwg.mxu0
        %v759 = vadd.f32 %v437, %v756
        %v760 = vld [vmem:[%s5] sm:$0x1]
        %v761 = vld [vmem:[%s6] sm:$0x1]
        %v762 = vsel %vm459, %v759, 0.0
        %763 = vadd.xlane.f32.xlu0 %v762
        %v764 = vpop.xlane.xlu0 %763
        %v765 = vrcp.pop 32.0
        %v766 = vmul.f32 32.0, %v765
        %v767 = vsub.f32 1.0, %v766
        %v768 = vmul.f32 %v765, %v767
        %v769 = vadd.f32 %v765, %v768
        %vm770 = vweird.f32 %v765
        %v771 = vsel %vm770, %v765, %v769
        %v772 = vmul.f32 %v764, %v771
        %v773 = vsub.f32 %v759, %v772
        %v774 = vmul.f32 %v773, %v773
        %v775 = vsel %vm459, %v774, 0.0
        %776 = vadd.xlane.f32.xlu0 %v775
        %v777 = vpop.xlane.xlu0 %776
        %v778 = vmul.f32 %v777, 0.032258064
        %v779 = vrsqrt.pop %v778
        %v780 = vmul.f32 %v779, %v778
        %v781 = vmul.f32 %v780, %v779
        %v782 = vmul.f32 0.5, %v781
        %v783 = vsub.f32 1.5, %v782
        %v784 = vmul.f32 %v779, %v783
        %v785 = vmul.f32 %v778, %v784
        %vm786 = vcmp.eq.f32.partialorder %v778, inf
        %v787 = vsel %vm786, %v778, %v785
        %vm788 = vcmp.eq.f32.partialorder %v778, 0.0
        %v789 = vand.u32 %v778, 2147483648
        %v790 = vsel %vm788, %v789, %v787
        %v792 = vperm.slane %v760, 0
        %v794 = vmul.f32 %v792, %v773
        %v795 = vadd.f32 %v790, 1e-06
        %v796 = vrcp.pop %v795
        %v797 = vmul.f32 %v795, %v796
        %v798 = vsub.f32 1.0, %v797
        %v799 = vmul.f32 %v796, %v798
        %v800 = vadd.f32 %v796, %v799
        %vm801 = vweird.f32 %v795
        %vm802 = vweird.f32 %v796
        %vm803 = vmor %vm801, %vm802
        %v804 = vsel %vm803, %v796, %v800
        %v805 = vand.u32 2147483647, %v795
        %vm806 = vcmp.eq.f32.partialorder %v805, 8.507059e+37
        %v807 = vand.u32 %v795, 2147483648
        %v808 = vor.u32 1.1754944e-38, %v807
        %v809 = vsel %vm806, %v808, %v804
        %v810 = vmul.f32 %v794, %v809
        %v812 = vperm.slane %v761, 0
        %v814 = vadd.f32 %v810, %v812
        %v815 = vpack.c.bf16 %v814, %v814
        %v816 = vld [vmem:[%s7] sm:$0xff]
        %v817 = vld [vmem:[%s7 + $0x8] sm:$0xff]
        %v818 = vld [vmem:[%s7 + $0x10] sm:$0xff]
        %v819 = vld [vmem:[%s7 + $0x18] sm:$0xff]
        %v820 = vld [vmem:[%s7 + $0x20] sm:$0xff]
        %v821 = vld [vmem:[%s7 + $0x28] sm:$0xff]
        %v822 = vld [vmem:[%s7 + $0x30] sm:$0xff]
        %v823 = vld [vmem:[%s7 + $0x38] sm:$0xff]
        %v824 = vld [vmem:[%s7 + $0x40] sm:$0xff]
        %v825 = vld [vmem:[%s7 + $0x48] sm:$0xff]
        %v826 = vld [vmem:[%s7 + $0x50] sm:$0xff]
        %v827 = vld [vmem:[%s7 + $0x58] sm:$0xff]
        %v828 = vld [vmem:[%s7 + $0x60] sm:$0xff]
        %v829 = vld [vmem:[%s7 + $0x68] sm:$0xff]
        %v830 = vld [vmem:[%s7 + $0x70] sm:$0xff]
        %v831 = vld [vmem:[%s7 + $0x78] sm:$0xff]
        %v832 = vld [vmem:[%s7 + $0x80] sm:$0xff]
        %v833 = vld [vmem:[%s7 + $0x88] sm:$0xff]
        %v834 = vld [vmem:[%s7 + $0x90] sm:$0xff]
        %v835 = vld [vmem:[%s7 + $0x98] sm:$0xff]
        %v836 = vld [vmem:[%s7 + $0xa0] sm:$0xff]
        %v837 = vld [vmem:[%s7 + $0xa8] sm:$0xff]
        %v838 = vld [vmem:[%s7 + $0xb0] sm:$0xff]
        %v839 = vld [vmem:[%s7 + $0xb8] sm:$0xff]
        %v840 = vld [vmem:[%s7 + $0xc0] sm:$0xff]
        %v841 = vld [vmem:[%s7 + $0xc8] sm:$0xff]
        %v842 = vld [vmem:[%s7 + $0xd0] sm:$0xff]
        %v843 = vld [vmem:[%s7 + $0xd8] sm:$0xff]
        %v844 = vld [vmem:[%s7 + $0xe0] sm:$0xff]
        %v845 = vld [vmem:[%s7 + $0xe8] sm:$0xff]
        %v846 = vld [vmem:[%s7 + $0xf0] sm:$0xff]
        %v847 = vld [vmem:[%s7 + $0xf8] sm:$0xff]
        %v848 = vld [vmem:[%s8] sm:$0xff]
        %v849 = vld [vmem:[%s8 + $0x8] sm:$0xff]
        %v852 = vperm.slane %v848, 0
        %v853 = vperm.slane %v848, 1
        %v854 = vperm.slane %v848, 2
        %v855 = vperm.slane %v848, 3
        %v856 = vperm.slane %v848, 4
        %v857 = vperm.slane %v848, 5
        %v858 = vperm.slane %v848, 6
        %v859 = vperm.slane %v848, 7
        %v860 = vperm.slane %v849, 0
        %v861 = vperm.slane %v849, 1
        %v862 = vperm.slane %v849, 2
        %v863 = vperm.slane %v849, 3
        %v864 = vperm.slane %v849, 4
        %v865 = vperm.slane %v849, 5
        %v866 = vperm.slane %v849, 6
        %v867 = vperm.slane %v849, 7
        %v916 = vunpack.c.l.b16 %v816
        %v917 = vunpack.c.h.b16 %v816
        %v918 = vunpack.c.l.b16 %v817
        %v919 = vunpack.c.h.b16 %v817
        %v920 = vunpack.c.l.b16 %v818
        %v921 = vunpack.c.h.b16 %v818
        %v922 = vunpack.c.l.b16 %v819
        %v923 = vunpack.c.h.b16 %v819
        %v924 = vunpack.c.l.b16 %v820
        %v925 = vunpack.c.h.b16 %v820
        %v926 = vunpack.c.l.b16 %v821
        %v927 = vunpack.c.h.b16 %v821
        %v928 = vunpack.c.l.b16 %v822
        %v929 = vunpack.c.h.b16 %v822
        %v930 = vunpack.c.l.b16 %v823
        %v931 = vunpack.c.h.b16 %v823
        %v932 = vunpack.c.l.b16 %v824
        %v933 = vunpack.c.h.b16 %v824
        %v934 = vunpack.c.l.b16 %v825
        %v935 = vunpack.c.h.b16 %v825
        %v936 = vunpack.c.l.b16 %v826
        %v937 = vunpack.c.h.b16 %v826
        %v938 = vunpack.c.l.b16 %v827
        %v939 = vunpack.c.h.b16 %v827
        %v940 = vunpack.c.l.b16 %v828
        %v941 = vunpack.c.h.b16 %v828
        %v942 = vunpack.c.l.b16 %v829
        %v943 = vunpack.c.h.b16 %v829
        %v944 = vunpack.c.l.b16 %v830
        %v945 = vunpack.c.h.b16 %v830
        %v946 = vunpack.c.l.b16 %v831
        %v947 = vunpack.c.h.b16 %v831
        %v948 = vunpack.c.l.b16 %v832
        %v949 = vunpack.c.h.b16 %v832
        %v950 = vunpack.c.l.b16 %v833
        %v951 = vunpack.c.h.b16 %v833
        %v952 = vunpack.c.l.b16 %v834
        %v953 = vunpack.c.h.b16 %v834
        %v954 = vunpack.c.l.b16 %v835
        %v955 = vunpack.c.h.b16 %v835
        %v956 = vunpack.c.l.b16 %v836
        %v957 = vunpack.c.h.b16 %v836
        %v958 = vunpack.c.l.b16 %v837
        %v959 = vunpack.c.h.b16 %v837
        %v960 = vunpack.c.l.b16 %v838
        %v961 = vunpack.c.h.b16 %v838
        %v962 = vunpack.c.l.b16 %v839
        %v963 = vunpack.c.h.b16 %v839
        %v964 = vunpack.c.l.b16 %v840
        %v965 = vunpack.c.h.b16 %v840
        %v966 = vunpack.c.l.b16 %v841
        %v967 = vunpack.c.h.b16 %v841
        %v968 = vunpack.c.l.b16 %v842
        %v969 = vunpack.c.h.b16 %v842
        %v970 = vunpack.c.l.b16 %v843
        %v971 = vunpack.c.h.b16 %v843
        %v972 = vunpack.c.l.b16 %v844
        %v973 = vunpack.c.h.b16 %v844
        %v974 = vunpack.c.l.b16 %v845
        %v975 = vunpack.c.h.b16 %v845
        %v976 = vunpack.c.l.b16 %v846
        %v977 = vunpack.c.h.b16 %v846
        %v978 = vunpack.c.l.b16 %v847
        %v979 = vunpack.c.h.b16 %v847
        %v980 = vpack.c.b16 %v932, %v916
        %v981 = vpack.c.b16 %v933, %v917
        %v982 = vpack.c.b16 %v934, %v918
        %v983 = vpack.c.b16 %v935, %v919
        %v984 = vpack.c.b16 %v936, %v920
        %v985 = vpack.c.b16 %v937, %v921
        %v986 = vpack.c.b16 %v938, %v922
        %v987 = vpack.c.b16 %v939, %v923
        %v988 = vpack.c.b16 %v940, %v924
        %v989 = vpack.c.b16 %v941, %v925
        %v990 = vpack.c.b16 %v942, %v926
        %v991 = vpack.c.b16 %v943, %v927
        %v992 = vpack.c.b16 %v944, %v928
        %v993 = vpack.c.b16 %v945, %v929
        %v994 = vpack.c.b16 %v946, %v930
        %v995 = vpack.c.b16 %v947, %v931
        %v996 = vpack.c.b16 %v964, %v948
        %v997 = vpack.c.b16 %v965, %v949
        %v998 = vpack.c.b16 %v966, %v950
        %v999 = vpack.c.b16 %v967, %v951
        %v1000 = vpack.c.b16 %v968, %v952
        %v1001 = vpack.c.b16 %v969, %v953
        %v1002 = vpack.c.b16 %v970, %v954
        %v1003 = vpack.c.b16 %v971, %v955
        %v1004 = vpack.c.b16 %v972, %v956
        %v1005 = vpack.c.b16 %v973, %v957
        %v1006 = vpack.c.b16 %v974, %v958
        %v1007 = vpack.c.b16 %v975, %v959
        %v1008 = vpack.c.b16 %v976, %v960
        %v1009 = vpack.c.b16 %v977, %v961
        %v1010 = vpack.c.b16 %v978, %v962
        %v1011 = vpack.c.b16 %v979, %v963
        %v1045 = vsel %vm459, %v815, 0
        %1047 = vmatpush.bf16.msra.mxu0 0
        %1048 = vmatpush.bf16.msra.mxu0 0
        %1049 = vmatpush.bf16.msra.mxu0 0
        %1050 = vmatpush.bf16.msra.mxu0 0
        %1051 = vmatpush.bf16.msra.mxu0 0
        %1052 = vmatpush.bf16.msra.mxu0 0
        %1053 = vmatpush.bf16.msra.mxu0 %v996
        %1054 = vmatpush.bf16.msra.mxu0 %v980
        %1055 = vmatmul.bf16.gmra.mxu0 %v1045
        %v1056 = vpop.f32.mrf.mxu0
        %v1057 = vadd.f32 %v852, %v1056
        %v1058 = vpop.f32.mrf.mxu0
        %1059 = vdwg.mxu0
        %1060 = vmatpush.bf16.msra.mxu0 0
        %1061 = vmatpush.bf16.msra.mxu0 0
        %1062 = vmatpush.bf16.msra.mxu0 0
        %1063 = vmatpush.bf16.msra.mxu0 0
        %1064 = vmatpush.bf16.msra.mxu0 0
        %1065 = vmatpush.bf16.msra.mxu0 0
        %1066 = vmatpush.bf16.msra.mxu0 %v997
        %1067 = vmatpush.bf16.msra.mxu0 %v981
        %1068 = vmatmul.bf16.gmra.mxu0 %v1045
        %v1069 = vpop.f32.mrf.mxu0
        %v1070 = vadd.f32 %v853, %v1069
        %v1071 = vpop.f32.mrf.mxu0
        %1072 = vdwg.mxu0
        %1073 = vmatpush.bf16.msra.mxu0 0
        %1074 = vmatpush.bf16.msra.mxu0 0
        %1075 = vmatpush.bf16.msra.mxu0 0
        %1076 = vmatpush.bf16.msra.mxu0 0
        %1077 = vmatpush.bf16.msra.mxu0 0
        %1078 = vmatpush.bf16.msra.mxu0 0
        %1079 = vmatpush.bf16.msra.mxu0 %v998
        %1080 = vmatpush.bf16.msra.mxu0 %v982
        %1081 = vmatmul.bf16.gmra.mxu0 %v1045
        %v1082 = vpop.f32.mrf.mxu0
        %v1083 = vadd.f32 %v854, %v1082
        %v1084 = vpop.f32.mrf.mxu0
        %1085 = vdwg.mxu0
        %1086 = vmatpush.bf16.msra.mxu0 0
        %1087 = vmatpush.bf16.msra.mxu0 0
        %1088 = vmatpush.bf16.msra.mxu0 0
        %1089 = vmatpush.bf16.msra.mxu0 0
        %1090 = vmatpush.bf16.msra.mxu0 0
        %1091 = vmatpush.bf16.msra.mxu0 0
        %1092 = vmatpush.bf16.msra.mxu0 %v999
        %1093 = vmatpush.bf16.msra.mxu0 %v983
        %1094 = vmatmul.bf16.gmra.mxu0 %v1045
        %v1095 = vpop.f32.mrf.mxu0
        %v1096 = vadd.f32 %v855, %v1095
        %v1097 = vpop.f32.mrf.mxu0
        %1098 = vdwg.mxu0
        %1099 = vmatpush.bf16.msra.mxu0 0
        %1100 = vmatpush.bf16.msra.mxu0 0
        %1101 = vmatpush.bf16.msra.mxu0 0
        %1102 = vmatpush.bf16.msra.mxu0 0
        %1103 = vmatpush.bf16.msra.mxu0 0
        %1104 = vmatpush.bf16.msra.mxu0 0
        %1105 = vmatpush.bf16.msra.mxu0 %v1000
        %1106 = vmatpush.bf16.msra.mxu0 %v984
        %1107 = vmatmul.bf16.gmra.mxu0 %v1045
        %v1108 = vpop.f32.mrf.mxu0
        %v1109 = vadd.f32 %v856, %v1108
        %v1110 = vpop.f32.mrf.mxu0
        %1111 = vdwg.mxu0
        %1112 = vmatpush.bf16.msra.mxu0 0
        %1113 = vmatpush.bf16.msra.mxu0 0
        %1114 = vmatpush.bf16.msra.mxu0 0
        %1115 = vmatpush.bf16.msra.mxu0 0
        %1116 = vmatpush.bf16.msra.mxu0 0
        %1117 = vmatpush.bf16.msra.mxu0 0
        %1118 = vmatpush.bf16.msra.mxu0 %v1001
        %1119 = vmatpush.bf16.msra.mxu0 %v985
        %1120 = vmatmul.bf16.gmra.mxu0 %v1045
        %v1121 = vpop.f32.mrf.mxu0
        %v1122 = vadd.f32 %v857, %v1121
        %v1123 = vpop.f32.mrf.mxu0
        %1124 = vdwg.mxu0
        %1125 = vmatpush.bf16.msra.mxu0 0
        %1126 = vmatpush.bf16.msra.mxu0 0
        %1127 = vmatpush.bf16.msra.mxu0 0
        %1128 = vmatpush.bf16.msra.mxu0 0
        %1129 = vmatpush.bf16.msra.mxu0 0
        %1130 = vmatpush.bf16.msra.mxu0 0
        %1131 = vmatpush.bf16.msra.mxu0 %v1002
        %1132 = vmatpush.bf16.msra.mxu0 %v986
        %1133 = vmatmul.bf16.gmra.mxu0 %v1045
        %v1134 = vpop.f32.mrf.mxu0
        %v1135 = vadd.f32 %v858, %v1134
        %v1136 = vpop.f32.mrf.mxu0
        %1137 = vdwg.mxu0
        %1138 = vmatpush.bf16.msra.mxu0 0
        %1139 = vmatpush.bf16.msra.mxu0 0
        %1140 = vmatpush.bf16.msra.mxu0 0
        %1141 = vmatpush.bf16.msra.mxu0 0
        %1142 = vmatpush.bf16.msra.mxu0 0
        %1143 = vmatpush.bf16.msra.mxu0 0
        %1144 = vmatpush.bf16.msra.mxu0 %v1003
        %1145 = vmatpush.bf16.msra.mxu0 %v987
        %1146 = vmatmul.bf16.gmra.mxu0 %v1045
        %v1147 = vpop.f32.mrf.mxu0
        %v1148 = vadd.f32 %v859, %v1147
        %v1149 = vpop.f32.mrf.mxu0
        %1150 = vdwg.mxu0
        %1151 = vmatpush.bf16.msra.mxu0 0
        %1152 = vmatpush.bf16.msra.mxu0 0
        %1153 = vmatpush.bf16.msra.mxu0 0
        %1154 = vmatpush.bf16.msra.mxu0 0
        %1155 = vmatpush.bf16.msra.mxu0 0
        %1156 = vmatpush.bf16.msra.mxu0 0
        %1157 = vmatpush.bf16.msra.mxu0 %v1004
        %1158 = vmatpush.bf16.msra.mxu0 %v988
        %1159 = vmatmul.bf16.gmra.mxu0 %v1045
        %v1160 = vpop.f32.mrf.mxu0
        %v1161 = vadd.f32 %v860, %v1160
        %v1162 = vpop.f32.mrf.mxu0
        %1163 = vdwg.mxu0
        %1164 = vmatpush.bf16.msra.mxu0 0
        %1165 = vmatpush.bf16.msra.mxu0 0
        %1166 = vmatpush.bf16.msra.mxu0 0
        %1167 = vmatpush.bf16.msra.mxu0 0
        %1168 = vmatpush.bf16.msra.mxu0 0
        %1169 = vmatpush.bf16.msra.mxu0 0
        %1170 = vmatpush.bf16.msra.mxu0 %v1005
        %1171 = vmatpush.bf16.msra.mxu0 %v989
        %1172 = vmatmul.bf16.gmra.mxu0 %v1045
        %v1173 = vpop.f32.mrf.mxu0
        %v1174 = vadd.f32 %v861, %v1173
        %v1175 = vpop.f32.mrf.mxu0
        %1176 = vdwg.mxu0
        %1177 = vmatpush.bf16.msra.mxu0 0
        %1178 = vmatpush.bf16.msra.mxu0 0
        %1179 = vmatpush.bf16.msra.mxu0 0
        %1180 = vmatpush.bf16.msra.mxu0 0
        %1181 = vmatpush.bf16.msra.mxu0 0
        %1182 = vmatpush.bf16.msra.mxu0 0
        %1183 = vmatpush.bf16.msra.mxu0 %v1006
        %1184 = vmatpush.bf16.msra.mxu0 %v990
        %1185 = vmatmul.bf16.gmra.mxu0 %v1045
        %v1186 = vpop.f32.mrf.mxu0
        %v1187 = vadd.f32 %v862, %v1186
        %v1188 = vpop.f32.mrf.mxu0
        %1189 = vdwg.mxu0
        %1190 = vmatpush.bf16.msra.mxu0 0
        %1191 = vmatpush.bf16.msra.mxu0 0
        %1192 = vmatpush.bf16.msra.mxu0 0
        %1193 = vmatpush.bf16.msra.mxu0 0
        %1194 = vmatpush.bf16.msra.mxu0 0
        %1195 = vmatpush.bf16.msra.mxu0 0
        %1196 = vmatpush.bf16.msra.mxu0 %v1007
        %1197 = vmatpush.bf16.msra.mxu0 %v991
        %1198 = vmatmul.bf16.gmra.mxu0 %v1045
        %v1199 = vpop.f32.mrf.mxu0
        %v1200 = vadd.f32 %v863, %v1199
        %v1201 = vpop.f32.mrf.mxu0
        %1202 = vdwg.mxu0
        %1203 = vmatpush.bf16.msra.mxu0 0
        %1204 = vmatpush.bf16.msra.mxu0 0
        %1205 = vmatpush.bf16.msra.mxu0 0
        %1206 = vmatpush.bf16.msra.mxu0 0
        %1207 = vmatpush.bf16.msra.mxu0 0
        %1208 = vmatpush.bf16.msra.mxu0 0
        %1209 = vmatpush.bf16.msra.mxu0 %v1008
        %1210 = vmatpush.bf16.msra.mxu0 %v992
        %1211 = vmatmul.bf16.gmra.mxu0 %v1045
        %v1212 = vpop.f32.mrf.mxu0
        %v1213 = vadd.f32 %v864, %v1212
        %v1214 = vpop.f32.mrf.mxu0
        %1215 = vdwg.mxu0
        %1216 = vmatpush.bf16.msra.mxu0 0
        %1217 = vmatpush.bf16.msra.mxu0 0
        %1218 = vmatpush.bf16.msra.mxu0 0
        %1219 = vmatpush.bf16.msra.mxu0 0
        %1220 = vmatpush.bf16.msra.mxu0 0
        %1221 = vmatpush.bf16.msra.mxu0 0
        %1222 = vmatpush.bf16.msra.mxu0 %v1009
        %1223 = vmatpush.bf16.msra.mxu0 %v993
        %1224 = vmatmul.bf16.gmra.mxu0 %v1045
        %v1225 = vpop.f32.mrf.mxu0
        %v1226 = vadd.f32 %v865, %v1225
        %v1227 = vpop.f32.mrf.mxu0
        %1228 = vdwg.mxu0
        %1229 = vmatpush.bf16.msra.mxu0 0
        %1230 = vmatpush.bf16.msra.mxu0 0
        %1231 = vmatpush.bf16.msra.mxu0 0
        %1232 = vmatpush.bf16.msra.mxu0 0
        %1233 = vmatpush.bf16.msra.mxu0 0
        %1234 = vmatpush.bf16.msra.mxu0 0
        %1235 = vmatpush.bf16.msra.mxu0 %v1010
        %1236 = vmatpush.bf16.msra.mxu0 %v994
        %1237 = vmatmul.bf16.gmra.mxu0 %v1045
        %v1238 = vpop.f32.mrf.mxu0
        %v1239 = vadd.f32 %v866, %v1238
        %v1240 = vpop.f32.mrf.mxu0
        %1241 = vdwg.mxu0
        %1242 = vmatpush.bf16.msra.mxu0 0
        %1243 = vmatpush.bf16.msra.mxu0 0
        %1244 = vmatpush.bf16.msra.mxu0 0
        %1245 = vmatpush.bf16.msra.mxu0 0
        %1246 = vmatpush.bf16.msra.mxu0 0
        %1247 = vmatpush.bf16.msra.mxu0 0
        %1248 = vmatpush.bf16.msra.mxu0 %v1011
        %1249 = vmatpush.bf16.msra.mxu0 %v995
        %1250 = vmatmul.bf16.gmra.mxu0 %v1045
        %v1251 = vpop.f32.mrf.mxu0
        %v1252 = vadd.f32 %v867, %v1251
        %v1253 = vpop.f32.mrf.mxu0
        %1254 = vdwg.mxu0
        %v1255 = vmax.f32 %v1057, 0.0
        %v1256 = vmax.f32 %v1070, 0.0
        %v1257 = vmax.f32 %v1083, 0.0
        %v1258 = vmax.f32 %v1096, 0.0
        %v1259 = vmax.f32 %v1109, 0.0
        %v1260 = vmax.f32 %v1122, 0.0
        %v1261 = vmax.f32 %v1135, 0.0
        %v1262 = vmax.f32 %v1148, 0.0
        %v1263 = vmax.f32 %v1161, 0.0
        %v1264 = vmax.f32 %v1174, 0.0
        %v1265 = vmax.f32 %v1187, 0.0
        %v1266 = vmax.f32 %v1200, 0.0
        %v1267 = vmax.f32 %v1213, 0.0
        %v1268 = vmax.f32 %v1226, 0.0
        %v1269 = vmax.f32 %v1239, 0.0
        %v1270 = vmax.f32 %v1252, 0.0
        %v1271 = vpack.c.bf16 %v1255, %v1255
        %v1272 = vpack.c.bf16 %v1256, %v1256
        %v1273 = vpack.c.bf16 %v1257, %v1257
        %v1274 = vpack.c.bf16 %v1258, %v1258
        %v1275 = vpack.c.bf16 %v1259, %v1259
        %v1276 = vpack.c.bf16 %v1260, %v1260
        %v1277 = vpack.c.bf16 %v1261, %v1261
        %v1278 = vpack.c.bf16 %v1262, %v1262
        %v1279 = vpack.c.bf16 %v1263, %v1263
        %v1280 = vpack.c.bf16 %v1264, %v1264
        %v1281 = vpack.c.bf16 %v1265, %v1265
        %v1282 = vpack.c.bf16 %v1266, %v1266
        %v1283 = vpack.c.bf16 %v1267, %v1267
        %v1284 = vpack.c.bf16 %v1268, %v1268
        %v1285 = vpack.c.bf16 %v1269, %v1269
        %v1286 = vpack.c.bf16 %v1270, %v1270
        %v1287 = vld [vmem:[%s9] sm:$0xf]
        %v1288 = vld [vmem:[%s9 + $0x4] sm:$0xf]
        %v1289 = vld [vmem:[%s9 + $0x8] sm:$0xf]
        %v1290 = vld [vmem:[%s9 + $0xc] sm:$0xf]
        %v1291 = vld [vmem:[%s9 + $0x10] sm:$0xf]
        %v1292 = vld [vmem:[%s9 + $0x14] sm:$0xf]
        %v1293 = vld [vmem:[%s9 + $0x18] sm:$0xf]
        %v1294 = vld [vmem:[%s9 + $0x1c] sm:$0xf]
        %v1295 = vld [vmem:[%s9 + $0x20] sm:$0xf]
        %v1296 = vld [vmem:[%s9 + $0x24] sm:$0xf]
        %v1297 = vld [vmem:[%s9 + $0x28] sm:$0xf]
        %v1298 = vld [vmem:[%s9 + $0x2c] sm:$0xf]
        %v1299 = vld [vmem:[%s9 + $0x30] sm:$0xf]
        %v1300 = vld [vmem:[%s9 + $0x34] sm:$0xf]
        %v1301 = vld [vmem:[%s9 + $0x38] sm:$0xf]
        %v1302 = vld [vmem:[%s9 + $0x3c] sm:$0xf]
        %v1303 = vld [vmem:[%s9 + $0x40] sm:$0xf]
        %v1304 = vld [vmem:[%s9 + $0x44] sm:$0xf]
        %v1305 = vld [vmem:[%s9 + $0x48] sm:$0xf]
        %v1306 = vld [vmem:[%s9 + $0x4c] sm:$0xf]
        %v1307 = vld [vmem:[%s9 + $0x50] sm:$0xf]
        %v1308 = vld [vmem:[%s9 + $0x54] sm:$0xf]
        %v1309 = vld [vmem:[%s9 + $0x58] sm:$0xf]
        %v1310 = vld [vmem:[%s9 + $0x5c] sm:$0xf]
        %v1311 = vld [vmem:[%s9 + $0x60] sm:$0xf]
        %v1312 = vld [vmem:[%s9 + $0x64] sm:$0xf]
        %v1313 = vld [vmem:[%s9 + $0x68] sm:$0xf]
        %v1314 = vld [vmem:[%s9 + $0x6c] sm:$0xf]
        %v1315 = vld [vmem:[%s9 + $0x70] sm:$0xf]
        %v1316 = vld [vmem:[%s9 + $0x74] sm:$0xf]
        %v1317 = vld [vmem:[%s9 + $0x78] sm:$0xf]
        %v1318 = vld [vmem:[%s9 + $0x7c] sm:$0xf]
        %v1319 = vld [vmem:[%s9 + $0x80] sm:$0xf]
        %v1320 = vld [vmem:[%s9 + $0x84] sm:$0xf]
        %v1321 = vld [vmem:[%s9 + $0x88] sm:$0xf]
        %v1322 = vld [vmem:[%s9 + $0x8c] sm:$0xf]
        %v1323 = vld [vmem:[%s9 + $0x90] sm:$0xf]
        %v1324 = vld [vmem:[%s9 + $0x94] sm:$0xf]
        %v1325 = vld [vmem:[%s9 + $0x98] sm:$0xf]
        %v1326 = vld [vmem:[%s9 + $0x9c] sm:$0xf]
        %v1327 = vld [vmem:[%s9 + $0xa0] sm:$0xf]
        %v1328 = vld [vmem:[%s9 + $0xa4] sm:$0xf]
        %v1329 = vld [vmem:[%s9 + $0xa8] sm:$0xf]
        %v1330 = vld [vmem:[%s9 + $0xac] sm:$0xf]
        %v1331 = vld [vmem:[%s9 + $0xb0] sm:$0xf]
        %v1332 = vld [vmem:[%s9 + $0xb4] sm:$0xf]
        %v1333 = vld [vmem:[%s9 + $0xb8] sm:$0xf]
        %v1334 = vld [vmem:[%s9 + $0xbc] sm:$0xf]
        %v1335 = vld [vmem:[%s9 + $0xc0] sm:$0xf]
        %v1336 = vld [vmem:[%s9 + $0xc4] sm:$0xf]
        %v1337 = vld [vmem:[%s9 + $0xc8] sm:$0xf]
        %v1338 = vld [vmem:[%s9 + $0xcc] sm:$0xf]
        %v1339 = vld [vmem:[%s9 + $0xd0] sm:$0xf]
        %v1340 = vld [vmem:[%s9 + $0xd4] sm:$0xf]
        %v1341 = vld [vmem:[%s9 + $0xd8] sm:$0xf]
        %v1342 = vld [vmem:[%s9 + $0xdc] sm:$0xf]
        %v1343 = vld [vmem:[%s9 + $0xe0] sm:$0xf]
        %v1344 = vld [vmem:[%s9 + $0xe4] sm:$0xf]
        %v1345 = vld [vmem:[%s9 + $0xe8] sm:$0xf]
        %v1346 = vld [vmem:[%s9 + $0xec] sm:$0xf]
        %v1347 = vld [vmem:[%s9 + $0xf0] sm:$0xf]
        %v1348 = vld [vmem:[%s9 + $0xf4] sm:$0xf]
        %v1349 = vld [vmem:[%s9 + $0xf8] sm:$0xf]
        %v1350 = vld [vmem:[%s9 + $0xfc] sm:$0xf]
        %v1351 = vld [vmem:[%s9 + $0x100] sm:$0xf]
        %v1352 = vld [vmem:[%s9 + $0x104] sm:$0xf]
        %v1353 = vld [vmem:[%s9 + $0x108] sm:$0xf]
        %v1354 = vld [vmem:[%s9 + $0x10c] sm:$0xf]
        %v1355 = vld [vmem:[%s9 + $0x110] sm:$0xf]
        %v1356 = vld [vmem:[%s9 + $0x114] sm:$0xf]
        %v1357 = vld [vmem:[%s9 + $0x118] sm:$0xf]
        %v1358 = vld [vmem:[%s9 + $0x11c] sm:$0xf]
        %v1359 = vld [vmem:[%s9 + $0x120] sm:$0xf]
        %v1360 = vld [vmem:[%s9 + $0x124] sm:$0xf]
        %v1361 = vld [vmem:[%s9 + $0x128] sm:$0xf]
        %v1362 = vld [vmem:[%s9 + $0x12c] sm:$0xf]
        %v1363 = vld [vmem:[%s9 + $0x130] sm:$0xf]
        %v1364 = vld [vmem:[%s9 + $0x134] sm:$0xf]
        %v1365 = vld [vmem:[%s9 + $0x138] sm:$0xf]
        %v1366 = vld [vmem:[%s9 + $0x13c] sm:$0xf]
        %v1367 = vld [vmem:[%s9 + $0x140] sm:$0xf]
        %v1368 = vld [vmem:[%s9 + $0x144] sm:$0xf]
        %v1369 = vld [vmem:[%s9 + $0x148] sm:$0xf]
        %v1370 = vld [vmem:[%s9 + $0x14c] sm:$0xf]
        %v1371 = vld [vmem:[%s9 + $0x150] sm:$0xf]
        %v1372 = vld [vmem:[%s9 + $0x154] sm:$0xf]
        %v1373 = vld [vmem:[%s9 + $0x158] sm:$0xf]
        %v1374 = vld [vmem:[%s9 + $0x15c] sm:$0xf]
        %v1375 = vld [vmem:[%s9 + $0x160] sm:$0xf]
        %v1376 = vld [vmem:[%s9 + $0x164] sm:$0xf]
        %v1377 = vld [vmem:[%s9 + $0x168] sm:$0xf]
        %v1378 = vld [vmem:[%s9 + $0x16c] sm:$0xf]
        %v1379 = vld [vmem:[%s9 + $0x170] sm:$0xf]
        %v1380 = vld [vmem:[%s9 + $0x174] sm:$0xf]
        %v1381 = vld [vmem:[%s9 + $0x178] sm:$0xf]
        %v1382 = vld [vmem:[%s9 + $0x17c] sm:$0xf]
        %v1383 = vld [vmem:[%s9 + $0x180] sm:$0xf]
        %v1384 = vld [vmem:[%s9 + $0x184] sm:$0xf]
        %v1385 = vld [vmem:[%s9 + $0x188] sm:$0xf]
        %v1386 = vld [vmem:[%s9 + $0x18c] sm:$0xf]
        %v1387 = vld [vmem:[%s9 + $0x190] sm:$0xf]
        %v1388 = vld [vmem:[%s9 + $0x194] sm:$0xf]
        %v1389 = vld [vmem:[%s9 + $0x198] sm:$0xf]
        %v1390 = vld [vmem:[%s9 + $0x19c] sm:$0xf]
        %v1391 = vld [vmem:[%s9 + $0x1a0] sm:$0xf]
        %v1392 = vld [vmem:[%s9 + $0x1a4] sm:$0xf]
        %v1393 = vld [vmem:[%s9 + $0x1a8] sm:$0xf]
        %v1394 = vld [vmem:[%s9 + $0x1ac] sm:$0xf]
        %v1395 = vld [vmem:[%s9 + $0x1b0] sm:$0xf]
        %v1396 = vld [vmem:[%s9 + $0x1b4] sm:$0xf]
        %v1397 = vld [vmem:[%s9 + $0x1b8] sm:$0xf]
        %v1398 = vld [vmem:[%s9 + $0x1bc] sm:$0xf]
        %v1399 = vld [vmem:[%s9 + $0x1c0] sm:$0xf]
        %v1400 = vld [vmem:[%s9 + $0x1c4] sm:$0xf]
        %v1401 = vld [vmem:[%s9 + $0x1c8] sm:$0xf]
        %v1402 = vld [vmem:[%s9 + $0x1cc] sm:$0xf]
        %v1403 = vld [vmem:[%s9 + $0x1d0] sm:$0xf]
        %v1404 = vld [vmem:[%s9 + $0x1d4] sm:$0xf]
        %v1405 = vld [vmem:[%s9 + $0x1d8] sm:$0xf]
        %v1406 = vld [vmem:[%s9 + $0x1dc] sm:$0xf]
        %v1407 = vld [vmem:[%s9 + $0x1e0] sm:$0xf]
        %v1408 = vld [vmem:[%s9 + $0x1e4] sm:$0xf]
        %v1409 = vld [vmem:[%s9 + $0x1e8] sm:$0xf]
        %v1410 = vld [vmem:[%s9 + $0x1ec] sm:$0xf]
        %v1411 = vld [vmem:[%s9 + $0x1f0] sm:$0xf]
        %v1412 = vld [vmem:[%s9 + $0x1f4] sm:$0xf]
        %v1413 = vld [vmem:[%s9 + $0x1f8] sm:$0xf]
        %v1414 = vld [vmem:[%s9 + $0x1fc] sm:$0xf]
        %v1415 = vld [vmem:[%s9 + $0x200] sm:$0xf]
        %v1416 = vld [vmem:[%s9 + $0x204] sm:$0xf]
        %v1417 = vld [vmem:[%s9 + $0x208] sm:$0xf]
        %v1418 = vld [vmem:[%s9 + $0x20c] sm:$0xf]
        %v1419 = vld [vmem:[%s9 + $0x210] sm:$0xf]
        %v1420 = vld [vmem:[%s9 + $0x214] sm:$0xf]
        %v1421 = vld [vmem:[%s9 + $0x218] sm:$0xf]
        %v1422 = vld [vmem:[%s9 + $0x21c] sm:$0xf]
        %v1423 = vld [vmem:[%s9 + $0x220] sm:$0xf]
        %v1424 = vld [vmem:[%s9 + $0x224] sm:$0xf]
        %v1425 = vld [vmem:[%s9 + $0x228] sm:$0xf]
        %v1426 = vld [vmem:[%s9 + $0x22c] sm:$0xf]
        %v1427 = vld [vmem:[%s9 + $0x230] sm:$0xf]
        %v1428 = vld [vmem:[%s9 + $0x234] sm:$0xf]
        %v1429 = vld [vmem:[%s9 + $0x238] sm:$0xf]
        %v1430 = vld [vmem:[%s9 + $0x23c] sm:$0xf]
        %v1431 = vld [vmem:[%s9 + $0x240] sm:$0xf]
        %v1432 = vld [vmem:[%s9 + $0x244] sm:$0xf]
        %v1433 = vld [vmem:[%s9 + $0x248] sm:$0xf]
        %v1434 = vld [vmem:[%s9 + $0x24c] sm:$0xf]
        %v1435 = vld [vmem:[%s9 + $0x250] sm:$0xf]
        %v1436 = vld [vmem:[%s9 + $0x254] sm:$0xf]
        %v1437 = vld [vmem:[%s9 + $0x258] sm:$0xf]
        %v1438 = vld [vmem:[%s9 + $0x25c] sm:$0xf]
        %v1439 = vld [vmem:[%s9 + $0x260] sm:$0xf]
        %v1440 = vld [vmem:[%s9 + $0x264] sm:$0xf]
        %v1441 = vld [vmem:[%s9 + $0x268] sm:$0xf]
        %v1442 = vld [vmem:[%s9 + $0x26c] sm:$0xf]
        %v1443 = vld [vmem:[%s9 + $0x270] sm:$0xf]
        %v1444 = vld [vmem:[%s9 + $0x274] sm:$0xf]
        %v1445 = vld [vmem:[%s9 + $0x278] sm:$0xf]
        %v1446 = vld [vmem:[%s9 + $0x27c] sm:$0xf]
        %v1447 = vld [vmem:[%s9 + $0x280] sm:$0xf]
        %v1448 = vld [vmem:[%s9 + $0x284] sm:$0xf]
        %v1449 = vld [vmem:[%s9 + $0x288] sm:$0xf]
        %v1450 = vld [vmem:[%s9 + $0x28c] sm:$0xf]
        %v1451 = vld [vmem:[%s9 + $0x290] sm:$0xf]
        %v1452 = vld [vmem:[%s9 + $0x294] sm:$0xf]
        %v1453 = vld [vmem:[%s9 + $0x298] sm:$0xf]
        %v1454 = vld [vmem:[%s9 + $0x29c] sm:$0xf]
        %v1455 = vld [vmem:[%s9 + $0x2a0] sm:$0xf]
        %v1456 = vld [vmem:[%s9 + $0x2a4] sm:$0xf]
        %v1457 = vld [vmem:[%s9 + $0x2a8] sm:$0xf]
        %v1458 = vld [vmem:[%s9 + $0x2ac] sm:$0xf]
        %v1459 = vld [vmem:[%s9 + $0x2b0] sm:$0xf]
        %v1460 = vld [vmem:[%s9 + $0x2b4] sm:$0xf]
        %v1461 = vld [vmem:[%s9 + $0x2b8] sm:$0xf]
        %v1462 = vld [vmem:[%s9 + $0x2bc] sm:$0xf]
        %v1463 = vld [vmem:[%s9 + $0x2c0] sm:$0xf]
        %v1464 = vld [vmem:[%s9 + $0x2c4] sm:$0xf]
        %v1465 = vld [vmem:[%s9 + $0x2c8] sm:$0xf]
        %v1466 = vld [vmem:[%s9 + $0x2cc] sm:$0xf]
        %v1467 = vld [vmem:[%s9 + $0x2d0] sm:$0xf]
        %v1468 = vld [vmem:[%s9 + $0x2d4] sm:$0xf]
        %v1469 = vld [vmem:[%s9 + $0x2d8] sm:$0xf]
        %v1470 = vld [vmem:[%s9 + $0x2dc] sm:$0xf]
        %v1471 = vld [vmem:[%s9 + $0x2e0] sm:$0xf]
        %v1472 = vld [vmem:[%s9 + $0x2e4] sm:$0xf]
        %v1473 = vld [vmem:[%s9 + $0x2e8] sm:$0xf]
        %v1474 = vld [vmem:[%s9 + $0x2ec] sm:$0xf]
        %v1475 = vld [vmem:[%s9 + $0x2f0] sm:$0xf]
        %v1476 = vld [vmem:[%s9 + $0x2f4] sm:$0xf]
        %v1477 = vld [vmem:[%s9 + $0x2f8] sm:$0xf]
        %v1478 = vld [vmem:[%s9 + $0x2fc] sm:$0xf]
        %v1479 = vld [vmem:[%s9 + $0x300] sm:$0xf]
        %v1480 = vld [vmem:[%s9 + $0x304] sm:$0xf]
        %v1481 = vld [vmem:[%s9 + $0x308] sm:$0xf]
        %v1482 = vld [vmem:[%s9 + $0x30c] sm:$0xf]
        %v1483 = vld [vmem:[%s9 + $0x310] sm:$0xf]
        %v1484 = vld [vmem:[%s9 + $0x314] sm:$0xf]
        %v1485 = vld [vmem:[%s9 + $0x318] sm:$0xf]
        %v1486 = vld [vmem:[%s9 + $0x31c] sm:$0xf]
        %v1487 = vld [vmem:[%s9 + $0x320] sm:$0xf]
        %v1488 = vld [vmem:[%s9 + $0x324] sm:$0xf]
        %v1489 = vld [vmem:[%s9 + $0x328] sm:$0xf]
        %v1490 = vld [vmem:[%s9 + $0x32c] sm:$0xf]
        %v1491 = vld [vmem:[%s9 + $0x330] sm:$0xf]
        %v1492 = vld [vmem:[%s9 + $0x334] sm:$0xf]
        %v1493 = vld [vmem:[%s9 + $0x338] sm:$0xf]
        %v1494 = vld [vmem:[%s9 + $0x33c] sm:$0xf]
        %v1495 = vld [vmem:[%s9 + $0x340] sm:$0xf]
        %v1496 = vld [vmem:[%s9 + $0x344] sm:$0xf]
        %v1497 = vld [vmem:[%s9 + $0x348] sm:$0xf]
        %v1498 = vld [vmem:[%s9 + $0x34c] sm:$0xf]
        %v1499 = vld [vmem:[%s9 + $0x350] sm:$0xf]
        %v1500 = vld [vmem:[%s9 + $0x354] sm:$0xf]
        %v1501 = vld [vmem:[%s9 + $0x358] sm:$0xf]
        %v1502 = vld [vmem:[%s9 + $0x35c] sm:$0xf]
        %v1503 = vld [vmem:[%s9 + $0x360] sm:$0xf]
        %v1504 = vld [vmem:[%s9 + $0x364] sm:$0xf]
        %v1505 = vld [vmem:[%s9 + $0x368] sm:$0xf]
        %v1506 = vld [vmem:[%s9 + $0x36c] sm:$0xf]
        %v1507 = vld [vmem:[%s9 + $0x370] sm:$0xf]
        %v1508 = vld [vmem:[%s9 + $0x374] sm:$0xf]
        %v1509 = vld [vmem:[%s9 + $0x378] sm:$0xf]
        %v1510 = vld [vmem:[%s9 + $0x37c] sm:$0xf]
        %v1511 = vld [vmem:[%s9 + $0x380] sm:$0xf]
        %v1512 = vld [vmem:[%s9 + $0x384] sm:$0xf]
        %v1513 = vld [vmem:[%s9 + $0x388] sm:$0xf]
        %v1514 = vld [vmem:[%s9 + $0x38c] sm:$0xf]
        %v1515 = vld [vmem:[%s9 + $0x390] sm:$0xf]
        %v1516 = vld [vmem:[%s9 + $0x394] sm:$0xf]
        %v1517 = vld [vmem:[%s9 + $0x398] sm:$0xf]
        %v1518 = vld [vmem:[%s9 + $0x39c] sm:$0xf]
        %v1519 = vld [vmem:[%s9 + $0x3a0] sm:$0xf]
        %v1520 = vld [vmem:[%s9 + $0x3a4] sm:$0xf]
        %v1521 = vld [vmem:[%s9 + $0x3a8] sm:$0xf]
        %v1522 = vld [vmem:[%s9 + $0x3ac] sm:$0xf]
        %v1523 = vld [vmem:[%s9 + $0x3b0] sm:$0xf]
        %v1524 = vld [vmem:[%s9 + $0x3b4] sm:$0xf]
        %v1525 = vld [vmem:[%s9 + $0x3b8] sm:$0xf]
        %v1526 = vld [vmem:[%s9 + $0x3bc] sm:$0xf]
        %v1527 = vld [vmem:[%s9 + $0x3c0] sm:$0xf]
        %v1528 = vld [vmem:[%s9 + $0x3c4] sm:$0xf]
        %v1529 = vld [vmem:[%s9 + $0x3c8] sm:$0xf]
        %v1530 = vld [vmem:[%s9 + $0x3cc] sm:$0xf]
        %v1531 = vld [vmem:[%s9 + $0x3d0] sm:$0xf]
        %v1532 = vld [vmem:[%s9 + $0x3d4] sm:$0xf]
        %v1533 = vld [vmem:[%s9 + $0x3d8] sm:$0xf]
        %v1534 = vld [vmem:[%s9 + $0x3dc] sm:$0xf]
        %v1535 = vld [vmem:[%s9 + $0x3e0] sm:$0xf]
        %v1536 = vld [vmem:[%s9 + $0x3e4] sm:$0xf]
        %v1537 = vld [vmem:[%s9 + $0x3e8] sm:$0xf]
        %v1538 = vld [vmem:[%s9 + $0x3ec] sm:$0xf]
        %v1539 = vld [vmem:[%s9 + $0x3f0] sm:$0xf]
        %v1540 = vld [vmem:[%s9 + $0x3f4] sm:$0xf]
        %v1541 = vld [vmem:[%s9 + $0x3f8] sm:$0xf]
        %v1542 = vld [vmem:[%s9 + $0x3fc] sm:$0xf]
        %v1543 = vld [vmem:[%s10] sm:$0x1]
        %v1545 = vperm.slane %v1543, 0
        %v1803 = vunpack.c.l.b16 %v1287
        %v1804 = vunpack.c.l.b16 %v1288
        %v1805 = vunpack.c.l.b16 %v1289
        %v1806 = vunpack.c.l.b16 %v1290
        %v1807 = vunpack.c.l.b16 %v1291
        %v1808 = vunpack.c.l.b16 %v1292
        %v1809 = vunpack.c.l.b16 %v1293
        %v1810 = vunpack.c.l.b16 %v1294
        %v1811 = vunpack.c.l.b16 %v1295
        %v1812 = vunpack.c.l.b16 %v1296
        %v1813 = vunpack.c.l.b16 %v1297
        %v1814 = vunpack.c.l.b16 %v1298
        %v1815 = vunpack.c.l.b16 %v1299
        %v1816 = vunpack.c.l.b16 %v1300
        %v1817 = vunpack.c.l.b16 %v1301
        %v1818 = vunpack.c.l.b16 %v1302
        %v1819 = vunpack.c.l.b16 %v1303
        %v1820 = vunpack.c.l.b16 %v1304
        %v1821 = vunpack.c.l.b16 %v1305
        %v1822 = vunpack.c.l.b16 %v1306
        %v1823 = vunpack.c.l.b16 %v1307
        %v1824 = vunpack.c.l.b16 %v1308
        %v1825 = vunpack.c.l.b16 %v1309
        %v1826 = vunpack.c.l.b16 %v1310
        %v1827 = vunpack.c.l.b16 %v1311
        %v1828 = vunpack.c.l.b16 %v1312
        %v1829 = vunpack.c.l.b16 %v1313
        %v1830 = vunpack.c.l.b16 %v1314
        %v1831 = vunpack.c.l.b16 %v1315
        %v1832 = vunpack.c.l.b16 %v1316
        %v1833 = vunpack.c.l.b16 %v1317
        %v1834 = vunpack.c.l.b16 %v1318
        %v1835 = vunpack.c.l.b16 %v1319
        %v1836 = vunpack.c.l.b16 %v1320
        %v1837 = vunpack.c.l.b16 %v1321
        %v1838 = vunpack.c.l.b16 %v1322
        %v1839 = vunpack.c.l.b16 %v1323
        %v1840 = vunpack.c.l.b16 %v1324
        %v1841 = vunpack.c.l.b16 %v1325
        %v1842 = vunpack.c.l.b16 %v1326
        %v1843 = vunpack.c.l.b16 %v1327
        %v1844 = vunpack.c.l.b16 %v1328
        %v1845 = vunpack.c.l.b16 %v1329
        %v1846 = vunpack.c.l.b16 %v1330
        %v1847 = vunpack.c.l.b16 %v1331
        %v1848 = vunpack.c.l.b16 %v1332
        %v1849 = vunpack.c.l.b16 %v1333
        %v1850 = vunpack.c.l.b16 %v1334
        %v1851 = vunpack.c.l.b16 %v1335
        %v1852 = vunpack.c.l.b16 %v1336
        %v1853 = vunpack.c.l.b16 %v1337
        %v1854 = vunpack.c.l.b16 %v1338
        %v1855 = vunpack.c.l.b16 %v1339
        %v1856 = vunpack.c.l.b16 %v1340
        %v1857 = vunpack.c.l.b16 %v1341
        %v1858 = vunpack.c.l.b16 %v1342
        %v1859 = vunpack.c.l.b16 %v1343
        %v1860 = vunpack.c.l.b16 %v1344
        %v1861 = vunpack.c.l.b16 %v1345
        %v1862 = vunpack.c.l.b16 %v1346
        %v1863 = vunpack.c.l.b16 %v1347
        %v1864 = vunpack.c.l.b16 %v1348
        %v1865 = vunpack.c.l.b16 %v1349
        %v1866 = vunpack.c.l.b16 %v1350
        %v1867 = vunpack.c.l.b16 %v1351
        %v1868 = vunpack.c.l.b16 %v1352
        %v1869 = vunpack.c.l.b16 %v1353
        %v1870 = vunpack.c.l.b16 %v1354
        %v1871 = vunpack.c.l.b16 %v1355
        %v1872 = vunpack.c.l.b16 %v1356
        %v1873 = vunpack.c.l.b16 %v1357
        %v1874 = vunpack.c.l.b16 %v1358
        %v1875 = vunpack.c.l.b16 %v1359
        %v1876 = vunpack.c.l.b16 %v1360
        %v1877 = vunpack.c.l.b16 %v1361
        %v1878 = vunpack.c.l.b16 %v1362
        %v1879 = vunpack.c.l.b16 %v1363
        %v1880 = vunpack.c.l.b16 %v1364
        %v1881 = vunpack.c.l.b16 %v1365
        %v1882 = vunpack.c.l.b16 %v1366
        %v1883 = vunpack.c.l.b16 %v1367
        %v1884 = vunpack.c.l.b16 %v1368
        %v1885 = vunpack.c.l.b16 %v1369
        %v1886 = vunpack.c.l.b16 %v1370
        %v1887 = vunpack.c.l.b16 %v1371
        %v1888 = vunpack.c.l.b16 %v1372
        %v1889 = vunpack.c.l.b16 %v1373
        %v1890 = vunpack.c.l.b16 %v1374
        %v1891 = vunpack.c.l.b16 %v1375
        %v1892 = vunpack.c.l.b16 %v1376
        %v1893 = vunpack.c.l.b16 %v1377
        %v1894 = vunpack.c.l.b16 %v1378
        %v1895 = vunpack.c.l.b16 %v1379
        %v1896 = vunpack.c.l.b16 %v1380
        %v1897 = vunpack.c.l.b16 %v1381
        %v1898 = vunpack.c.l.b16 %v1382
        %v1899 = vunpack.c.l.b16 %v1383
        %v1900 = vunpack.c.l.b16 %v1384
        %v1901 = vunpack.c.l.b16 %v1385
        %v1902 = vunpack.c.l.b16 %v1386
        %v1903 = vunpack.c.l.b16 %v1387
        %v1904 = vunpack.c.l.b16 %v1388
        %v1905 = vunpack.c.l.b16 %v1389
        %v1906 = vunpack.c.l.b16 %v1390
        %v1907 = vunpack.c.l.b16 %v1391
        %v1908 = vunpack.c.l.b16 %v1392
        %v1909 = vunpack.c.l.b16 %v1393
        %v1910 = vunpack.c.l.b16 %v1394
        %v1911 = vunpack.c.l.b16 %v1395
        %v1912 = vunpack.c.l.b16 %v1396
        %v1913 = vunpack.c.l.b16 %v1397
        %v1914 = vunpack.c.l.b16 %v1398
        %v1915 = vunpack.c.l.b16 %v1399
        %v1916 = vunpack.c.l.b16 %v1400
        %v1917 = vunpack.c.l.b16 %v1401
        %v1918 = vunpack.c.l.b16 %v1402
        %v1919 = vunpack.c.l.b16 %v1403
        %v1920 = vunpack.c.l.b16 %v1404
        %v1921 = vunpack.c.l.b16 %v1405
        %v1922 = vunpack.c.l.b16 %v1406
        %v1923 = vunpack.c.l.b16 %v1407
        %v1924 = vunpack.c.l.b16 %v1408
        %v1925 = vunpack.c.l.b16 %v1409
        %v1926 = vunpack.c.l.b16 %v1410
        %v1927 = vunpack.c.l.b16 %v1411
        %v1928 = vunpack.c.l.b16 %v1412
        %v1929 = vunpack.c.l.b16 %v1413
        %v1930 = vunpack.c.l.b16 %v1414
        %v1931 = vunpack.c.l.b16 %v1415
        %v1932 = vunpack.c.l.b16 %v1416
        %v1933 = vunpack.c.l.b16 %v1417
        %v1934 = vunpack.c.l.b16 %v1418
        %v1935 = vunpack.c.l.b16 %v1419
        %v1936 = vunpack.c.l.b16 %v1420
        %v1937 = vunpack.c.l.b16 %v1421
        %v1938 = vunpack.c.l.b16 %v1422
        %v1939 = vunpack.c.l.b16 %v1423
        %v1940 = vunpack.c.l.b16 %v1424
        %v1941 = vunpack.c.l.b16 %v1425
        %v1942 = vunpack.c.l.b16 %v1426
        %v1943 = vunpack.c.l.b16 %v1427
        %v1944 = vunpack.c.l.b16 %v1428
        %v1945 = vunpack.c.l.b16 %v1429
        %v1946 = vunpack.c.l.b16 %v1430
        %v1947 = vunpack.c.l.b16 %v1431
        %v1948 = vunpack.c.l.b16 %v1432
        %v1949 = vunpack.c.l.b16 %v1433
        %v1950 = vunpack.c.l.b16 %v1434
        %v1951 = vunpack.c.l.b16 %v1435
        %v1952 = vunpack.c.l.b16 %v1436
        %v1953 = vunpack.c.l.b16 %v1437
        %v1954 = vunpack.c.l.b16 %v1438
        %v1955 = vunpack.c.l.b16 %v1439
        %v1956 = vunpack.c.l.b16 %v1440
        %v1957 = vunpack.c.l.b16 %v1441
        %v1958 = vunpack.c.l.b16 %v1442
        %v1959 = vunpack.c.l.b16 %v1443
        %v1960 = vunpack.c.l.b16 %v1444
        %v1961 = vunpack.c.l.b16 %v1445
        %v1962 = vunpack.c.l.b16 %v1446
        %v1963 = vunpack.c.l.b16 %v1447
        %v1964 = vunpack.c.l.b16 %v1448
        %v1965 = vunpack.c.l.b16 %v1449
        %v1966 = vunpack.c.l.b16 %v1450
        %v1967 = vunpack.c.l.b16 %v1451
        %v1968 = vunpack.c.l.b16 %v1452
        %v1969 = vunpack.c.l.b16 %v1453
        %v1970 = vunpack.c.l.b16 %v1454
        %v1971 = vunpack.c.l.b16 %v1455
        %v1972 = vunpack.c.l.b16 %v1456
        %v1973 = vunpack.c.l.b16 %v1457
        %v1974 = vunpack.c.l.b16 %v1458
        %v1975 = vunpack.c.l.b16 %v1459
        %v1976 = vunpack.c.l.b16 %v1460
        %v1977 = vunpack.c.l.b16 %v1461
        %v1978 = vunpack.c.l.b16 %v1462
        %v1979 = vunpack.c.l.b16 %v1463
        %v1980 = vunpack.c.l.b16 %v1464
        %v1981 = vunpack.c.l.b16 %v1465
        %v1982 = vunpack.c.l.b16 %v1466
        %v1983 = vunpack.c.l.b16 %v1467
        %v1984 = vunpack.c.l.b16 %v1468
        %v1985 = vunpack.c.l.b16 %v1469
        %v1986 = vunpack.c.l.b16 %v1470
        %v1987 = vunpack.c.l.b16 %v1471
        %v1988 = vunpack.c.l.b16 %v1472
        %v1989 = vunpack.c.l.b16 %v1473
        %v1990 = vunpack.c.l.b16 %v1474
        %v1991 = vunpack.c.l.b16 %v1475
        %v1992 = vunpack.c.l.b16 %v1476
        %v1993 = vunpack.c.l.b16 %v1477
        %v1994 = vunpack.c.l.b16 %v1478
        %v1995 = vunpack.c.l.b16 %v1479
        %v1996 = vunpack.c.l.b16 %v1480
        %v1997 = vunpack.c.l.b16 %v1481
        %v1998 = vunpack.c.l.b16 %v1482
        %v1999 = vunpack.c.l.b16 %v1483
        %v2000 = vunpack.c.l.b16 %v1484
        %v2001 = vunpack.c.l.b16 %v1485
        %v2002 = vunpack.c.l.b16 %v1486
        %v2003 = vunpack.c.l.b16 %v1487
        %v2004 = vunpack.c.l.b16 %v1488
        %v2005 = vunpack.c.l.b16 %v1489
        %v2006 = vunpack.c.l.b16 %v1490
        %v2007 = vunpack.c.l.b16 %v1491
        %v2008 = vunpack.c.l.b16 %v1492
        %v2009 = vunpack.c.l.b16 %v1493
        %v2010 = vunpack.c.l.b16 %v1494
        %v2011 = vunpack.c.l.b16 %v1495
        %v2012 = vunpack.c.l.b16 %v1496
        %v2013 = vunpack.c.l.b16 %v1497
        %v2014 = vunpack.c.l.b16 %v1498
        %v2015 = vunpack.c.l.b16 %v1499
        %v2016 = vunpack.c.l.b16 %v1500
        %v2017 = vunpack.c.l.b16 %v1501
        %v2018 = vunpack.c.l.b16 %v1502
        %v2019 = vunpack.c.l.b16 %v1503
        %v2020 = vunpack.c.l.b16 %v1504
        %v2021 = vunpack.c.l.b16 %v1505
        %v2022 = vunpack.c.l.b16 %v1506
        %v2023 = vunpack.c.l.b16 %v1507
        %v2024 = vunpack.c.l.b16 %v1508
        %v2025 = vunpack.c.l.b16 %v1509
        %v2026 = vunpack.c.l.b16 %v1510
        %v2027 = vunpack.c.l.b16 %v1511
        %v2028 = vunpack.c.l.b16 %v1512
        %v2029 = vunpack.c.l.b16 %v1513
        %v2030 = vunpack.c.l.b16 %v1514
        %v2031 = vunpack.c.l.b16 %v1515
        %v2032 = vunpack.c.l.b16 %v1516
        %v2033 = vunpack.c.l.b16 %v1517
        %v2034 = vunpack.c.l.b16 %v1518
        %v2035 = vunpack.c.l.b16 %v1519
        %v2036 = vunpack.c.l.b16 %v1520
        %v2037 = vunpack.c.l.b16 %v1521
        %v2038 = vunpack.c.l.b16 %v1522
        %v2039 = vunpack.c.l.b16 %v1523
        %v2040 = vunpack.c.l.b16 %v1524
        %v2041 = vunpack.c.l.b16 %v1525
        %v2042 = vunpack.c.l.b16 %v1526
        %v2043 = vunpack.c.l.b16 %v1527
        %v2044 = vunpack.c.l.b16 %v1528
        %v2045 = vunpack.c.l.b16 %v1529
        %v2046 = vunpack.c.l.b16 %v1530
        %v2047 = vunpack.c.l.b16 %v1531
        %v2048 = vunpack.c.l.b16 %v1532
        %v2049 = vunpack.c.l.b16 %v1533
        %v2050 = vunpack.c.l.b16 %v1534
        %v2051 = vunpack.c.l.b16 %v1535
        %v2052 = vunpack.c.l.b16 %v1536
        %v2053 = vunpack.c.l.b16 %v1537
        %v2054 = vunpack.c.l.b16 %v1538
        %v2055 = vunpack.c.l.b16 %v1539
        %v2056 = vunpack.c.l.b16 %v1540
        %v2057 = vunpack.c.l.b16 %v1541
        %v2058 = vunpack.c.l.b16 %v1542
        %v2059 = vpack.c.b16 %v1804, %v1803
        %v2060 = vpack.c.b16 %v1806, %v1805
        %v2061 = vpack.c.b16 %v1808, %v1807
        %v2062 = vpack.c.b16 %v1810, %v1809
        %v2063 = vpack.c.b16 %v1812, %v1811
        %v2064 = vpack.c.b16 %v1814, %v1813
        %v2065 = vpack.c.b16 %v1816, %v1815
        %v2066 = vpack.c.b16 %v1818, %v1817
        %v2067 = vpack.c.b16 %v1820, %v1819
        %v2068 = vpack.c.b16 %v1822, %v1821
        %v2069 = vpack.c.b16 %v1824, %v1823
        %v2070 = vpack.c.b16 %v1826, %v1825
        %v2071 = vpack.c.b16 %v1828, %v1827
        %v2072 = vpack.c.b16 %v1830, %v1829
        %v2073 = vpack.c.b16 %v1832, %v1831
        %v2074 = vpack.c.b16 %v1834, %v1833
        %v2075 = vpack.c.b16 %v1836, %v1835
        %v2076 = vpack.c.b16 %v1838, %v1837
        %v2077 = vpack.c.b16 %v1840, %v1839
        %v2078 = vpack.c.b16 %v1842, %v1841
        %v2079 = vpack.c.b16 %v1844, %v1843
        %v2080 = vpack.c.b16 %v1846, %v1845
        %v2081 = vpack.c.b16 %v1848, %v1847
        %v2082 = vpack.c.b16 %v1850, %v1849
        %v2083 = vpack.c.b16 %v1852, %v1851
        %v2084 = vpack.c.b16 %v1854, %v1853
        %v2085 = vpack.c.b16 %v1856, %v1855
        %v2086 = vpack.c.b16 %v1858, %v1857
        %v2087 = vpack.c.b16 %v1860, %v1859
        %v2088 = vpack.c.b16 %v1862, %v1861
        %v2089 = vpack.c.b16 %v1864, %v1863
        %v2090 = vpack.c.b16 %v1866, %v1865
        %v2091 = vpack.c.b16 %v1868, %v1867
        %v2092 = vpack.c.b16 %v1870, %v1869
        %v2093 = vpack.c.b16 %v1872, %v1871
        %v2094 = vpack.c.b16 %v1874, %v1873
        %v2095 = vpack.c.b16 %v1876, %v1875
        %v2096 = vpack.c.b16 %v1878, %v1877
        %v2097 = vpack.c.b16 %v1880, %v1879
        %v2098 = vpack.c.b16 %v1882, %v1881
        %v2099 = vpack.c.b16 %v1884, %v1883
        %v2100 = vpack.c.b16 %v1886, %v1885
        %v2101 = vpack.c.b16 %v1888, %v1887
        %v2102 = vpack.c.b16 %v1890, %v1889
        %v2103 = vpack.c.b16 %v1892, %v1891
        %v2104 = vpack.c.b16 %v1894, %v1893
        %v2105 = vpack.c.b16 %v1896, %v1895
        %v2106 = vpack.c.b16 %v1898, %v1897
        %v2107 = vpack.c.b16 %v1900, %v1899
        %v2108 = vpack.c.b16 %v1902, %v1901
        %v2109 = vpack.c.b16 %v1904, %v1903
        %v2110 = vpack.c.b16 %v1906, %v1905
        %v2111 = vpack.c.b16 %v1908, %v1907
        %v2112 = vpack.c.b16 %v1910, %v1909
        %v2113 = vpack.c.b16 %v1912, %v1911
        %v2114 = vpack.c.b16 %v1914, %v1913
        %v2115 = vpack.c.b16 %v1916, %v1915
        %v2116 = vpack.c.b16 %v1918, %v1917
        %v2117 = vpack.c.b16 %v1920, %v1919
        %v2118 = vpack.c.b16 %v1922, %v1921
        %v2119 = vpack.c.b16 %v1924, %v1923
        %v2120 = vpack.c.b16 %v1926, %v1925
        %v2121 = vpack.c.b16 %v1928, %v1927
        %v2122 = vpack.c.b16 %v1930, %v1929
        %v2123 = vpack.c.b16 %v1932, %v1931
        %v2124 = vpack.c.b16 %v1934, %v1933
        %v2125 = vpack.c.b16 %v1936, %v1935
        %v2126 = vpack.c.b16 %v1938, %v1937
        %v2127 = vpack.c.b16 %v1940, %v1939
        %v2128 = vpack.c.b16 %v1942, %v1941
        %v2129 = vpack.c.b16 %v1944, %v1943
        %v2130 = vpack.c.b16 %v1946, %v1945
        %v2131 = vpack.c.b16 %v1948, %v1947
        %v2132 = vpack.c.b16 %v1950, %v1949
        %v2133 = vpack.c.b16 %v1952, %v1951
        %v2134 = vpack.c.b16 %v1954, %v1953
        %v2135 = vpack.c.b16 %v1956, %v1955
        %v2136 = vpack.c.b16 %v1958, %v1957
        %v2137 = vpack.c.b16 %v1960, %v1959
        %v2138 = vpack.c.b16 %v1962, %v1961
        %v2139 = vpack.c.b16 %v1964, %v1963
        %v2140 = vpack.c.b16 %v1966, %v1965
        %v2141 = vpack.c.b16 %v1968, %v1967
        %v2142 = vpack.c.b16 %v1970, %v1969
        %v2143 = vpack.c.b16 %v1972, %v1971
        %v2144 = vpack.c.b16 %v1974, %v1973
        %v2145 = vpack.c.b16 %v1976, %v1975
        %v2146 = vpack.c.b16 %v1978, %v1977
        %v2147 = vpack.c.b16 %v1980, %v1979
        %v2148 = vpack.c.b16 %v1982, %v1981
        %v2149 = vpack.c.b16 %v1984, %v1983
        %v2150 = vpack.c.b16 %v1986, %v1985
        %v2151 = vpack.c.b16 %v1988, %v1987
        %v2152 = vpack.c.b16 %v1990, %v1989
        %v2153 = vpack.c.b16 %v1992, %v1991
        %v2154 = vpack.c.b16 %v1994, %v1993
        %v2155 = vpack.c.b16 %v1996, %v1995
        %v2156 = vpack.c.b16 %v1998, %v1997
        %v2157 = vpack.c.b16 %v2000, %v1999
        %v2158 = vpack.c.b16 %v2002, %v2001
        %v2159 = vpack.c.b16 %v2004, %v2003
        %v2160 = vpack.c.b16 %v2006, %v2005
        %v2161 = vpack.c.b16 %v2008, %v2007
        %v2162 = vpack.c.b16 %v2010, %v2009
        %v2163 = vpack.c.b16 %v2012, %v2011
        %v2164 = vpack.c.b16 %v2014, %v2013
        %v2165 = vpack.c.b16 %v2016, %v2015
        %v2166 = vpack.c.b16 %v2018, %v2017
        %v2167 = vpack.c.b16 %v2020, %v2019
        %v2168 = vpack.c.b16 %v2022, %v2021
        %v2169 = vpack.c.b16 %v2024, %v2023
        %v2170 = vpack.c.b16 %v2026, %v2025
        %v2171 = vpack.c.b16 %v2028, %v2027
        %v2172 = vpack.c.b16 %v2030, %v2029
        %v2173 = vpack.c.b16 %v2032, %v2031
        %v2174 = vpack.c.b16 %v2034, %v2033
        %v2175 = vpack.c.b16 %v2036, %v2035
        %v2176 = vpack.c.b16 %v2038, %v2037
        %v2177 = vpack.c.b16 %v2040, %v2039
        %v2178 = vpack.c.b16 %v2042, %v2041
        %v2179 = vpack.c.b16 %v2044, %v2043
        %v2180 = vpack.c.b16 %v2046, %v2045
        %v2181 = vpack.c.b16 %v2048, %v2047
        %v2182 = vpack.c.b16 %v2050, %v2049
        %v2183 = vpack.c.b16 %v2052, %v2051
        %v2184 = vpack.c.b16 %v2054, %v2053
        %v2185 = vpack.c.b16 %v2056, %v2055
        %v2186 = vpack.c.b16 %v2058, %v2057
        %2315 = vmatpush.bf16.msra.mxu0 %v2066
        %2316 = vmatpush.bf16.msra.mxu0 %v2065
        %2317 = vmatpush.bf16.msra.mxu0 %v2064
        %2318 = vmatpush.bf16.msra.mxu0 %v2063
        %2319 = vmatpush.bf16.msra.mxu0 %v2062
        %2320 = vmatpush.bf16.msra.mxu0 %v2061
        %2321 = vmatpush.bf16.msra.mxu0 %v2060
        %2322 = vmatpush.bf16.msra.mxu0 %v2059
        %2323 = vmatmul.bf16.gmra.mxu0 %v1271
        %v2324 = vpop.f32.mrf.mxu0
        %v2325 = vadd.f32 %v1545, %v2324
        %v2326 = vpop.f32.mrf.mxu0
        %2327 = vdwg.mxu0
        %2328 = vmatpush.bf16.msra.mxu0 %v2074
        %2329 = vmatpush.bf16.msra.mxu0 %v2073
        %2330 = vmatpush.bf16.msra.mxu0 %v2072
        %2331 = vmatpush.bf16.msra.mxu0 %v2071
        %2332 = vmatpush.bf16.msra.mxu0 %v2070
        %2333 = vmatpush.bf16.msra.mxu0 %v2069
        %2334 = vmatpush.bf16.msra.mxu0 %v2068
        %2335 = vmatpush.bf16.msra.mxu0 %v2067
        %2336 = vmatmul.bf16.gmra.mxu0 %v1272
        %v2337 = vpop.f32.mrf.mxu0
        %v2338 = vadd.f32 %v2325, %v2337
        %v2339 = vpop.f32.mrf.mxu0
        %2340 = vdwg.mxu0
        %2341 = vmatpush.bf16.msra.mxu0 %v2082
        %2342 = vmatpush.bf16.msra.mxu0 %v2081
        %2343 = vmatpush.bf16.msra.mxu0 %v2080
        %2344 = vmatpush.bf16.msra.mxu0 %v2079
        %2345 = vmatpush.bf16.msra.mxu0 %v2078
        %2346 = vmatpush.bf16.msra.mxu0 %v2077
        %2347 = vmatpush.bf16.msra.mxu0 %v2076
        %2348 = vmatpush.bf16.msra.mxu0 %v2075
        %2349 = vmatmul.bf16.gmra.mxu0 %v1273
        %v2350 = vpop.f32.mrf.mxu0
        %v2351 = vadd.f32 %v2338, %v2350
        %v2352 = vpop.f32.mrf.mxu0
        %2353 = vdwg.mxu0
        %2354 = vmatpush.bf16.msra.mxu0 %v2090
        %2355 = vmatpush.bf16.msra.mxu0 %v2089
        %2356 = vmatpush.bf16.msra.mxu0 %v2088
        %2357 = vmatpush.bf16.msra.mxu0 %v2087
        %2358 = vmatpush.bf16.msra.mxu0 %v2086
        %2359 = vmatpush.bf16.msra.mxu0 %v2085
        %2360 = vmatpush.bf16.msra.mxu0 %v2084
        %2361 = vmatpush.bf16.msra.mxu0 %v2083
        %2362 = vmatmul.bf16.gmra.mxu0 %v1274
        %v2363 = vpop.f32.mrf.mxu0
        %v2364 = vadd.f32 %v2351, %v2363
        %v2365 = vpop.f32.mrf.mxu0
        %2366 = vdwg.mxu0
        %2367 = vmatpush.bf16.msra.mxu0 %v2098
        %2368 = vmatpush.bf16.msra.mxu0 %v2097
        %2369 = vmatpush.bf16.msra.mxu0 %v2096
        %2370 = vmatpush.bf16.msra.mxu0 %v2095
        %2371 = vmatpush.bf16.msra.mxu0 %v2094
        %2372 = vmatpush.bf16.msra.mxu0 %v2093
        %2373 = vmatpush.bf16.msra.mxu0 %v2092
        %2374 = vmatpush.bf16.msra.mxu0 %v2091
        %2375 = vmatmul.bf16.gmra.mxu0 %v1275
        %v2376 = vpop.f32.mrf.mxu0
        %v2377 = vadd.f32 %v2364, %v2376
        %v2378 = vpop.f32.mrf.mxu0
        %2379 = vdwg.mxu0
        %2380 = vmatpush.bf16.msra.mxu0 %v2106
        %2381 = vmatpush.bf16.msra.mxu0 %v2105
        %2382 = vmatpush.bf16.msra.mxu0 %v2104
        %2383 = vmatpush.bf16.msra.mxu0 %v2103
        %2384 = vmatpush.bf16.msra.mxu0 %v2102
        %2385 = vmatpush.bf16.msra.mxu0 %v2101
        %2386 = vmatpush.bf16.msra.mxu0 %v2100
        %2387 = vmatpush.bf16.msra.mxu0 %v2099
        %2388 = vmatmul.bf16.gmra.mxu0 %v1276
        %v2389 = vpop.f32.mrf.mxu0
        %v2390 = vadd.f32 %v2377, %v2389
        %v2391 = vpop.f32.mrf.mxu0
        %2392 = vdwg.mxu0
        %2393 = vmatpush.bf16.msra.mxu0 %v2114
        %2394 = vmatpush.bf16.msra.mxu0 %v2113
        %2395 = vmatpush.bf16.msra.mxu0 %v2112
        %2396 = vmatpush.bf16.msra.mxu0 %v2111
        %2397 = vmatpush.bf16.msra.mxu0 %v2110
        %2398 = vmatpush.bf16.msra.mxu0 %v2109
        %2399 = vmatpush.bf16.msra.mxu0 %v2108
        %2400 = vmatpush.bf16.msra.mxu0 %v2107
        %2401 = vmatmul.bf16.gmra.mxu0 %v1277
        %v2402 = vpop.f32.mrf.mxu0
        %v2403 = vadd.f32 %v2390, %v2402
        %v2404 = vpop.f32.mrf.mxu0
        %2405 = vdwg.mxu0
        %2406 = vmatpush.bf16.msra.mxu0 %v2122
        %2407 = vmatpush.bf16.msra.mxu0 %v2121
        %2408 = vmatpush.bf16.msra.mxu0 %v2120
        %2409 = vmatpush.bf16.msra.mxu0 %v2119
        %2410 = vmatpush.bf16.msra.mxu0 %v2118
        %2411 = vmatpush.bf16.msra.mxu0 %v2117
        %2412 = vmatpush.bf16.msra.mxu0 %v2116
        %2413 = vmatpush.bf16.msra.mxu0 %v2115
        %2414 = vmatmul.bf16.gmra.mxu0 %v1278
        %v2415 = vpop.f32.mrf.mxu0
        %v2416 = vadd.f32 %v2403, %v2415
        %v2417 = vpop.f32.mrf.mxu0
        %2418 = vdwg.mxu0
        %2419 = vmatpush.bf16.msra.mxu0 %v2130
        %2420 = vmatpush.bf16.msra.mxu0 %v2129
        %2421 = vmatpush.bf16.msra.mxu0 %v2128
        %2422 = vmatpush.bf16.msra.mxu0 %v2127
        %2423 = vmatpush.bf16.msra.mxu0 %v2126
        %2424 = vmatpush.bf16.msra.mxu0 %v2125
        %2425 = vmatpush.bf16.msra.mxu0 %v2124
        %2426 = vmatpush.bf16.msra.mxu0 %v2123
        %2427 = vmatmul.bf16.gmra.mxu0 %v1279
        %v2428 = vpop.f32.mrf.mxu0
        %v2429 = vadd.f32 %v2416, %v2428
        %v2430 = vpop.f32.mrf.mxu0
        %2431 = vdwg.mxu0
        %2432 = vmatpush.bf16.msra.mxu0 %v2138
        %2433 = vmatpush.bf16.msra.mxu0 %v2137
        %2434 = vmatpush.bf16.msra.mxu0 %v2136
        %2435 = vmatpush.bf16.msra.mxu0 %v2135
        %2436 = vmatpush.bf16.msra.mxu0 %v2134
        %2437 = vmatpush.bf16.msra.mxu0 %v2133
        %2438 = vmatpush.bf16.msra.mxu0 %v2132
        %2439 = vmatpush.bf16.msra.mxu0 %v2131
        %2440 = vmatmul.bf16.gmra.mxu0 %v1280
        %v2441 = vpop.f32.mrf.mxu0
        %v2442 = vadd.f32 %v2429, %v2441
        %v2443 = vpop.f32.mrf.mxu0
        %2444 = vdwg.mxu0
        %2445 = vmatpush.bf16.msra.mxu0 %v2146
        %2446 = vmatpush.bf16.msra.mxu0 %v2145
        %2447 = vmatpush.bf16.msra.mxu0 %v2144
        %2448 = vmatpush.bf16.msra.mxu0 %v2143
        %2449 = vmatpush.bf16.msra.mxu0 %v2142
        %2450 = vmatpush.bf16.msra.mxu0 %v2141
        %2451 = vmatpush.bf16.msra.mxu0 %v2140
        %2452 = vmatpush.bf16.msra.mxu0 %v2139
        %2453 = vmatmul.bf16.gmra.mxu0 %v1281
        %v2454 = vpop.f32.mrf.mxu0
        %v2455 = vadd.f32 %v2442, %v2454
        %v2456 = vpop.f32.mrf.mxu0
        %2457 = vdwg.mxu0
        %2458 = vmatpush.bf16.msra.mxu0 %v2154
        %2459 = vmatpush.bf16.msra.mxu0 %v2153
        %2460 = vmatpush.bf16.msra.mxu0 %v2152
        %2461 = vmatpush.bf16.msra.mxu0 %v2151
        %2462 = vmatpush.bf16.msra.mxu0 %v2150
        %2463 = vmatpush.bf16.msra.mxu0 %v2149
        %2464 = vmatpush.bf16.msra.mxu0 %v2148
        %2465 = vmatpush.bf16.msra.mxu0 %v2147
        %2466 = vmatmul.bf16.gmra.mxu0 %v1282
        %v2467 = vpop.f32.mrf.mxu0
        %v2468 = vadd.f32 %v2455, %v2467
        %v2469 = vpop.f32.mrf.mxu0
        %2470 = vdwg.mxu0
        %2471 = vmatpush.bf16.msra.mxu0 %v2162
        %2472 = vmatpush.bf16.msra.mxu0 %v2161
        %2473 = vmatpush.bf16.msra.mxu0 %v2160
        %2474 = vmatpush.bf16.msra.mxu0 %v2159
        %2475 = vmatpush.bf16.msra.mxu0 %v2158
        %2476 = vmatpush.bf16.msra.mxu0 %v2157
        %2477 = vmatpush.bf16.msra.mxu0 %v2156
        %2478 = vmatpush.bf16.msra.mxu0 %v2155
        %2479 = vmatmul.bf16.gmra.mxu0 %v1283
        %v2480 = vpop.f32.mrf.mxu0
        %v2481 = vadd.f32 %v2468, %v2480
        %v2482 = vpop.f32.mrf.mxu0
        %2483 = vdwg.mxu0
        %2484 = vmatpush.bf16.msra.mxu0 %v2170
        %2485 = vmatpush.bf16.msra.mxu0 %v2169
        %2486 = vmatpush.bf16.msra.mxu0 %v2168
        %2487 = vmatpush.bf16.msra.mxu0 %v2167
        %2488 = vmatpush.bf16.msra.mxu0 %v2166
        %2489 = vmatpush.bf16.msra.mxu0 %v2165
        %2490 = vmatpush.bf16.msra.mxu0 %v2164
        %2491 = vmatpush.bf16.msra.mxu0 %v2163
        %2492 = vmatmul.bf16.gmra.mxu0 %v1284
        %v2493 = vpop.f32.mrf.mxu0
        %v2494 = vadd.f32 %v2481, %v2493
        %v2495 = vpop.f32.mrf.mxu0
        %2496 = vdwg.mxu0
        %2497 = vmatpush.bf16.msra.mxu0 %v2178
        %2498 = vmatpush.bf16.msra.mxu0 %v2177
        %2499 = vmatpush.bf16.msra.mxu0 %v2176
        %2500 = vmatpush.bf16.msra.mxu0 %v2175
        %2501 = vmatpush.bf16.msra.mxu0 %v2174
        %2502 = vmatpush.bf16.msra.mxu0 %v2173
        %2503 = vmatpush.bf16.msra.mxu0 %v2172
        %2504 = vmatpush.bf16.msra.mxu0 %v2171
        %2505 = vmatmul.bf16.gmra.mxu0 %v1285
        %v2506 = vpop.f32.mrf.mxu0
        %v2507 = vadd.f32 %v2494, %v2506
        %v2508 = vpop.f32.mrf.mxu0
        %2509 = vdwg.mxu0
        %2510 = vmatpush.bf16.msra.mxu0 %v2186
        %2511 = vmatpush.bf16.msra.mxu0 %v2185
        %2512 = vmatpush.bf16.msra.mxu0 %v2184
        %2513 = vmatpush.bf16.msra.mxu0 %v2183
        %2514 = vmatpush.bf16.msra.mxu0 %v2182
        %2515 = vmatpush.bf16.msra.mxu0 %v2181
        %2516 = vmatpush.bf16.msra.mxu0 %v2180
        %2517 = vmatpush.bf16.msra.mxu0 %v2179
        %2518 = vmatmul.bf16.gmra.mxu0 %v1286
        %v2519 = vpop.f32.mrf.mxu0
        %v2520 = vadd.f32 %v2507, %v2519
        %v2521 = vpop.f32.mrf.mxu0
        %2522 = vdwg.mxu0
        %v2523 = vadd.f32 %v814, %v2520
        %v2524 = vld [vmem:[%s11] sm:$0x1]
        %v2525 = vld [vmem:[%s12] sm:$0x1]
        %v2526 = vsel %vm459, %v2523, 0.0
        %2527 = vadd.xlane.f32.xlu0 %v2526
        %v2528 = vpop.xlane.xlu0 %2527
        %v2529 = vmul.f32 %v2528, %v771
        %v2530 = vsub.f32 %v2523, %v2529
        %v2531 = vmul.f32 %v2530, %v2530
        %v2532 = vsel %vm459, %v2531, 0.0
        %2533 = vadd.xlane.f32.xlu0 %v2532
        %v2534 = vpop.xlane.xlu0 %2533
        %v2535 = vmul.f32 %v2534, 0.032258064
        %v2536 = vrsqrt.pop %v2535
        %v2537 = vmul.f32 %v2536, %v2535
        %v2538 = vmul.f32 %v2537, %v2536
        %v2539 = vmul.f32 0.5, %v2538
        %v2540 = vsub.f32 1.5, %v2539
        %v2541 = vmul.f32 %v2536, %v2540
        %v2542 = vmul.f32 %v2535, %v2541
        %vm2543 = vcmp.eq.f32.partialorder %v2535, inf
        %v2544 = vsel %vm2543, %v2535, %v2542
        %vm2545 = vcmp.eq.f32.partialorder %v2535, 0.0
        %v2546 = vand.u32 %v2535, 2147483648
        %v2547 = vsel %vm2545, %v2546, %v2544
        %v2549 = vperm.slane %v2524, 0
        %v2551 = vmul.f32 %v2549, %v2530
        %v2552 = vadd.f32 %v2547, 1e-06
        %v2553 = vrcp.pop %v2552
        %v2554 = vmul.f32 %v2552, %v2553
        %v2555 = vsub.f32 1.0, %v2554
        %v2556 = vmul.f32 %v2553, %v2555
        %v2557 = vadd.f32 %v2553, %v2556
        %vm2558 = vweird.f32 %v2552
        %vm2559 = vweird.f32 %v2553
        %vm2560 = vmor %vm2558, %vm2559
        %v2561 = vsel %vm2560, %v2553, %v2557
        %v2562 = vand.u32 2147483647, %v2552
        %vm2563 = vcmp.eq.f32.partialorder %v2562, 8.507059e+37
        %v2564 = vand.u32 %v2552, 2147483648
        %v2565 = vor.u32 1.1754944e-38, %v2564
        %v2566 = vsel %vm2563, %v2565, %v2561
        %v2567 = vmul.f32 %v2551, %v2566
        %v2569 = vperm.slane %v2525, 0
        %v2571 = vadd.f32 %v2567, %v2569
        %2572 = vst.msk [vmem:[%s431] sm:$0xff] %vm459, %v2571
        %s2573 = sand.u32 %s313, 1
        %s2574 = scalar_lea.sflag [#allocation3], %s2573
        %s2575 = sand.u32 %s313, 1
        %s2576 = smul.addr %s2575, 8
        %s2577 = scalar_lea.vmem [#allocation2], %s2576
        // Predicated region
        $region73: #{tpu_custom_call.1} parent=71 // pred_check
          %p2578 = pneg %p323
        $region74: #{tpu_custom_call.1} parent=71 // pred_check_branch
          %2580 = sbr.rel (%p2578) target = $region76
        $region75: #{tpu_custom_call.1} parent=71 // pred_region
          %2582 = vsyncadd %s2574, 0
          %s2583 = smul.addr %s27, 8
          %s2584 = scalar_lea.hbm %s13, %s2583
          %s2586 = sshll.u32 %s2577, 4
          %s2587 = int_to_ptr.vmem [resolvable:$true] %s2586
          %s2588 = sshll.u32 %s2584, 4
          %s2589 = int_to_ptr.hbm [resolvable:$true] %s2588
          %2591 = dma.vmem_to_hbm [thread:$0]  %s2587, 128, %s2589, %s2574
        $region76: #{tpu_custom_call.1} parent=71 // pred_fallthru
          _
      $region72: #{tpu_custom_call.1} parent=5 // pred_fallthru
        _
      %p2592 = scmp.le.s32.totalorder 2, %s22
      // Predicated region
      $region77: #{tpu_custom_call.1} parent=5 // pred_check
        %p2593 = pneg %p2592
      $region78: #{tpu_custom_call.1} parent=5 // pred_check_branch
        %2595 = sbr.rel (%p2593) target = $region80
      $region79: #{tpu_custom_call.1} parent=5 // pred_region
        %s2596 = ssub.s32 %s22, 2
        // Predicated region
        $region81: #{tpu_custom_call.1} parent=79 // pred_check
          %p2597 = pneg %p329
        $region82: #{tpu_custom_call.1} parent=79 // pred_check_branch
          %2599 = sbr.rel (%p2597) target = $region84
        $region83: #{tpu_custom_call.1} parent=79 // pred_region
          %s2600 = sand.u32 %s314, 1
          %s2601 = scalar_lea.sflag [#allocation3], %s2600
          %s2602 = sand.u32 %s314, 1
          %s2603 = smul.addr %s2602, 8
          %s2604 = scalar_lea.vmem [#allocation2], %s2603
          %2606 = dma.done %s2601, 128
        $region84: #{tpu_custom_call.1} parent=79 // pred_fallthru
          _
      $region80: #{tpu_custom_call.1} parent=5 // pred_fallthru
        _
    $region6: #{tpu_custom_call.1} parent=1 // loop_footer
      %s26 = sadd.s32 1, %s22
    $region7: #{tpu_custom_call.1} parent=1 // loop_footer_branch
      %21 = sbr.rel target = $region3
    $region8: #{tpu_custom_call.1} parent=1 // loop_exit
      _
    %2607 = vsyncpa [#allocation3], 1
    %s2608 = scalar_lea.sflag [#allocation3], 1
    %2609 = vsyncpa %s2608, 1

</llo_original>
